<compile_context>
chip_gen: v6e
topology: v6e:2x2x1
jax: 0.10.0
libtpu: 0.0.40
codegen_flags: <defaults>
</compile_context>

<pallas_src>
import math

import numpy as np
import jax
import jax.numpy as jnp
from jax import lax
from jax.experimental import pallas as pl
from jax.experimental.pallas import tpu as pltpu


# ----------------------------- parameter slab --------------------------------
def _align8(n: int) -> int:
    return (n + 7) & ~7


T1_OFF = 0                            # (140, 240) conv1 Toeplitz
B1_OFF = _align8(T1_OFF + 140)        # (1, 240)
T2_OFF = _align8(B1_OFF + 1)          # (1200, 160) conv2 Toeplitz
B2_OFF = _align8(T2_OFF + 1200)       # (1, 160)
TF1_OFF = _align8(B2_OFF + 1)         # (640, 50)  fc1 (flatten-permuted)
BF1_OFF = _align8(TF1_OFF + 640)      # (1, 50)
WF2_OFF = _align8(BF1_OFF + 1)        # (50, 10)   fc2
BF2_OFF = _align8(WF2_OFF + 50)       # (1, 10)
P_ROWS = _align8(BF2_OFF + 1)         # 2072
P_LANES = 256


def pack_params(params):
    """Pack PyTorch-shaped params into one (P_ROWS, 256) f32 slab (host side)."""
    (w1, b1), (w2, b2), (wf1, bf1), (wf2, bf2) = params
    w1 = np.asarray(w1); b1 = np.asarray(b1)
    w2 = np.asarray(w2); b2 = np.asarray(b2)
    wf1 = np.asarray(wf1); bf1 = np.asarray(bf1)
    wf2 = np.asarray(wf2); bf2 = np.asarray(bf2)

    slab = np.zeros((P_ROWS, P_LANES), np.float32)

    # conv1 row-Toeplitz: out[row, ox*10+co] = sum_{ky,ix} x5[row, ky*28+ix]*T1[...]
    t1 = np.zeros((140, 240), np.float32)
    for ky in range(5):
        for kx in range(5):
            for ox in range(24):
                t1[ky * 28 + ox + kx, ox * 10:(ox + 1) * 10] = w1[:, 0, ky, kx]
    slab[T1_OFF:T1_OFF + 140, :240] = t1
    slab[B1_OFF, :240] = np.tile(b1, 24)

    # conv2 row-Toeplitz; pool1 input lanes are 20*px + ci (odd groups unused -> 0 rows)
    t2 = np.zeros((1200, 160), np.float32)
    for ky in range(5):
        for kx in range(5):
            for ox in range(8):
                px = ox + kx
                t2[ky * 240 + 20 * px: ky * 240 + 20 * px + 10,
                   ox * 20:(ox + 1) * 20] = w2[:, :, ky, kx].T    # (ci, co)
    slab[T2_OFF:T2_OFF + 1200, :160] = t2
    slab[B2_OFF, :160] = np.tile(b2, 8)

    # fc1: pool2 lanes are 40*x + c per row y; torch flatten index is c*16+y*4+x
    tf1 = np.zeros((640, 50), np.float32)
    for y in range(4):
        for x in range(4):
            for c in range(20):
                tf1[y * 160 + 40 * x + c, :] = wf1[:, c * 16 + y * 4 + x]
    slab[TF1_OFF:TF1_OFF + 640, :50] = tf1
    slab[BF1_OFF, :50] = bf1

    slab[WF2_OFF:WF2_OFF + 50, :10] = wf2.T
    slab[BF2_OFF, :10] = bf2
    return jnp.asarray(slab)


# --------------------------------- kernel ------------------------------------
def single_input_net_kernel(x_ref, p_ref, o_ref):
    # x_ref: (4, 7, 28) -- input rows split by residue mod 4: x_ref[m, q, :] = row 4q+m
    # p_ref: (P_ROWS, 256) weight slab (resident)
    # o_ref: (1, 10)
    f32 = jnp.float32

    def rot_lanes(v, k):
        # v_rot[:, j] = v[:, (j + k) % L]  (explicit lane rotation)
        return jnp.concatenate([v[:, k:], v[:, :k]], axis=-1)

    # ---- conv1: one Toeplitz matmul.  X5[r*6+j, ky*28+ix] = x[4j+r+ky, ix] ----
    res_rows = []
    for r in range(4):
        taps = []
        for ky in range(5):
            m = (r + ky) % 4
            s = (r + ky) // 4
            taps.append(x_ref[m, s:s + 6, :])                 # (6, 28)
        res_rows.append(jnp.concatenate(taps, axis=-1))       # (6, 140)
    x5 = jnp.concatenate(res_rows, axis=0)                    # (24, 140)

    c1 = jnp.dot(x5, p_ref[T1_OFF:T1_OFF + 140, :240],
                 preferred_element_type=f32) + p_ref[B1_OFF:B1_OFF + 1, :240]
    # rows: [0:6]=oy%4==0, [6:12]==1, [12:18]==2, [18:24]==3; lanes = ox*10+co

    # ---- 2x2 maxpool + relu ----
    p1e = jnp.maximum(c1[0:6, :], c1[6:12, :])      # pool rows 0,2,...,10
    p1o = jnp.maximum(c1[12:18, :], c1[18:24, :])   # pool rows 1,3,...,11
    p1e = jnp.maximum(jnp.maximum(p1e, rot_lanes(p1e, 10)), 0.0)
    p1o = jnp.maximum(jnp.maximum(p1o, rot_lanes(p1o, 10)), 0.0)
    # valid lanes: 20*px + ci (px in 0..11, ci in 0..9); others are zero-weighted later

    # ---- conv2: one Toeplitz matmul with K=1200 ----
    even = jnp.concatenate([p1e[0:4], p1o[0:4], p1e[1:5], p1o[1:5], p1e[2:6]],
                           axis=-1)                            # conv2 rows 0,2,4,6
    odd = jnp.concatenate([p1o[0:4], p1e[1:5], p1o[1:5], p1e[2:6], p1o[2:6]],
                          axis=-1)                             # conv2 rows 1,3,5,7
    x5_2 = jnp.concatenate([even, odd], axis=0)                # (8, 1200)

    c2 = jnp.dot(x5_2, p_ref[T2_OFF:T2_OFF + 1200, :160],
                 preferred_element_type=f32) + p_ref[B2_OFF:B2_OFF + 1, :160]
    # TODO(synk): Dropout2d(0.3) is identity in eval mode; train-mode channel
    # dropout is not implemented in-kernel.

    # ---- 2x2 maxpool + relu ----
    p2 = jnp.maximum(c2[0:4, :], c2[4:8, :])                   # (4, 160)
    p2 = jnp.maximum(jnp.maximum(p2, rot_lanes(p2, 20)), 0.0)
    # valid lanes: 40*x + co (x in 0..3, co in 0..19)

    # ---- flatten (4 rows -> 640 lanes) + fc1 + relu ----
    flat = jnp.concatenate([p2[0:1], p2[1:2], p2[2:3], p2[3:4]], axis=-1)  # (1, 640)
    h = jnp.dot(flat, p_ref[TF1_OFF:TF1_OFF + 640, :50],
                preferred_element_type=f32) + p_ref[BF1_OFF:BF1_OFF + 1, :50]
    h = jnp.maximum(h, 0.0)

    # ---- fc2 + log_softmax ----
    z = jnp.dot(h, p_ref[WF2_OFF:WF2_OFF + 50, :10],
                preferred_element_type=f32) + p_ref[BF2_OFF:BF2_OFF + 1, :10]
    m = jnp.max(z, axis=-1, keepdims=True)
    lse = jnp.log(jnp.sum(jnp.exp(z - m), axis=-1, keepdims=True)) + m
    o_ref[...] = z - lse


# -------------------------------- wrapper ------------------------------------
@jax.jit
def single_input_net_forward(x_nchw, param_slab):
    B = x_nchw.shape[0]
    assert x_nchw.shape[1:] == (1, 28, 28)
    # Split input rows by residue mod 4: x4[b, m, q, :] = x[b, 0, 4q+m, :]
    x4 = x_nchw.reshape(B, 7, 4, 28).transpose(0, 2, 1, 3)
    out = pl.pallas_call(
        single_input_net_kernel,
        out_shape=jax.ShapeDtypeStruct((B, 1, 10), jnp.float32),
        grid=(B,),
        in_specs=[pl.BlockSpec((None, 4, 7, 28), lambda i: (i, 0, 0, 0)),
                  pl.BlockSpec((P_ROWS, P_LANES), lambda i: (0, 0))],
        out_specs=pl.BlockSpec((None, 1, 10), lambda i: (i, 0, 0)),
        compiler_params=pltpu.CompilerParams(
            dimension_semantics=("parallel",)),
    )(x4, param_slab)
    return out.reshape(B, 10)


# ---------------------------- reference / init -------------------------------
def init_params(key):
    def u(k, shape, fan_in):
        bound = 1.0 / math.sqrt(fan_in)
        return jax.random.uniform(k, shape, jnp.float32, -bound, bound)
    ks = jax.random.split(key, 8)
    w1 = u(ks[0], (10, 1, 5, 5), 25)
    b1 = u(ks[1], (10,), 25)
    w2 = u(ks[2], (20, 10, 5, 5), 250)
    b2 = u(ks[3], (20,), 250)
    wf1 = u(ks[4], (50, 320), 320)
    bf1 = u(ks[5], (50,), 320)
    wf2 = u(ks[6], (10, 50), 50)
    bf2 = u(ks[7], (10,), 50)
    return ((w1, b1), (w2, b2), (wf1, bf1), (wf2, bf2))


def reference_forward(x, params):
    """Plain-JAX mirror of the PyTorch forward (eval mode)."""
    (w1, b1), (w2, b2), (wf1, bf1), (wf2, bf2) = params
    hi = lax.Precision.HIGHEST

    def conv(h, w, b):
        y = lax.conv_general_dilated(
            h, w, window_strides=(1, 1), padding="VALID",
            dimension_numbers=("NCHW", "OIHW", "NCHW"), precision=hi)
        return y + b[None, :, None, None]

    def pool(h):
        return lax.reduce_window(h, -jnp.inf, lax.max,
                                 (1, 1, 2, 2), (1, 1, 2, 2), "VALID")

    h = jnp.maximum(pool(conv(x, w1, b1)), 0.0)
    h = jnp.maximum(pool(conv(h, w2, b2)), 0.0)   # Dropout2d: identity in eval
    h = h.reshape(h.shape[0], 320)
    h = jnp.maximum(jnp.dot(h, wf1.T, precision=hi) + bf1, 0.0)
    z = jnp.dot(h, wf2.T, precision=hi) + bf2
    return jax.nn.log_softmax(z, axis=1)


if __name__ == "__main__":
    key = jax.random.PRNGKey(0)
    k_x, k_p = jax.random.split(key)

    batch = 2
    x = jax.random.normal(k_x, (batch, 1, 28, 28), dtype=jnp.float32)
    params = init_params(k_p)
    slab = pack_params(params)

    out = jax.block_until_ready(single_input_net_forward(x, slab))

    ref = reference_forward(x, params)
    assert out.shape == (batch, 10)
    max_err = float(jnp.max(jnp.abs(out - ref)))
    assert max_err < 1e-3, f"max abs error vs reference: {max_err}"

    print("KERNEL_OK")
</pallas_src>

<mosaic_0001>
module attributes {stable_mosaic.version = 11 : i64} {
  func.func @single_input_net_kernel(%arg0: i32, %arg1: memref<1x4x7x28xf32, #tpu.memory_space<vmem>>, %arg2: memref<2072x256xf32, #tpu.memory_space<vmem>>, %arg3: memref<1x1x10xf32, #tpu.memory_space<vmem>>) attributes {dimension_semantics = [#tpu.dimension_semantics<parallel>], iteration_bounds = array<i64: 2>, scalar_prefetch = 0 : i64, scratch_operands = 0 : i64, tpu.core_type = #tpu.core_type<tc>, window_params = [{transform_indices = @transform_0, window_bounds = array<i64: 1, 4, 7, 28>}, {pipeline_mode = #tpu.pipeline_mode<synchronous>, transform_indices = @transform_1, window_bounds = array<i64: 2072, 256>}, {transform_indices = @transform_2, window_bounds = array<i64: 1, 1, 10>}]} {
    %c0 = arith.constant 0 : index
    %c0_0 = arith.constant 0 : index
    %c0_1 = arith.constant 0 : index
    %c0_2 = arith.constant 0 : index
    %0 = vector.load %arg1[%c0, %c0_0, %c0_1, %c0_2] : memref<1x4x7x28xf32, #tpu.memory_space<vmem>>, vector<1x1x6x28xf32>
    %1 = vector.shape_cast %0 : vector<1x1x6x28xf32> to vector<6x28xf32>
    %c0_3 = arith.constant 0 : index
    %c1 = arith.constant 1 : index
    %c0_4 = arith.constant 0 : index
    %c0_5 = arith.constant 0 : index
    %2 = vector.load %arg1[%c0_3, %c1, %c0_4, %c0_5] : memref<1x4x7x28xf32, #tpu.memory_space<vmem>>, vector<1x1x6x28xf32>
    %3 = vector.shape_cast %2 : vector<1x1x6x28xf32> to vector<6x28xf32>
    %c0_6 = arith.constant 0 : index
    %c2 = arith.constant 2 : index
    %c0_7 = arith.constant 0 : index
    %c0_8 = arith.constant 0 : index
    %4 = vector.load %arg1[%c0_6, %c2, %c0_7, %c0_8] : memref<1x4x7x28xf32, #tpu.memory_space<vmem>>, vector<1x1x6x28xf32>
    %5 = vector.shape_cast %4 : vector<1x1x6x28xf32> to vector<6x28xf32>
    %c0_9 = arith.constant 0 : index
    %c3 = arith.constant 3 : index
    %c0_10 = arith.constant 0 : index
    %c0_11 = arith.constant 0 : index
    %6 = vector.load %arg1[%c0_9, %c3, %c0_10, %c0_11] : memref<1x4x7x28xf32, #tpu.memory_space<vmem>>, vector<1x1x6x28xf32>
    %7 = vector.shape_cast %6 : vector<1x1x6x28xf32> to vector<6x28xf32>
    %c0_12 = arith.constant 0 : index
    %c0_13 = arith.constant 0 : index
    %c1_14 = arith.constant 1 : index
    %c0_15 = arith.constant 0 : index
    %8 = vector.load %arg1[%c0_12, %c0_13, %c1_14, %c0_15] : memref<1x4x7x28xf32, #tpu.memory_space<vmem>>, vector<1x1x6x28xf32>
    %9 = vector.shape_cast %8 : vector<1x1x6x28xf32> to vector<6x28xf32>
    %10 = tpu.concatenate %1, %3, %5, %7, %9 in 1 : vector<6x28xf32>, vector<6x28xf32>, vector<6x28xf32>, vector<6x28xf32>, vector<6x28xf32> -> vector<6x140xf32>
    %c0_16 = arith.constant 0 : index
    %c1_17 = arith.constant 1 : index
    %c0_18 = arith.constant 0 : index
    %c0_19 = arith.constant 0 : index
    %11 = vector.load %arg1[%c0_16, %c1_17, %c0_18, %c0_19] : memref<1x4x7x28xf32, #tpu.memory_space<vmem>>, vector<1x1x6x28xf32>
    %12 = vector.shape_cast %11 : vector<1x1x6x28xf32> to vector<6x28xf32>
    %c0_20 = arith.constant 0 : index
    %c2_21 = arith.constant 2 : index
    %c0_22 = arith.constant 0 : index
    %c0_23 = arith.constant 0 : index
    %13 = vector.load %arg1[%c0_20, %c2_21, %c0_22, %c0_23] : memref<1x4x7x28xf32, #tpu.memory_space<vmem>>, vector<1x1x6x28xf32>
    %14 = vector.shape_cast %13 : vector<1x1x6x28xf32> to vector<6x28xf32>
    %c0_24 = arith.constant 0 : index
    %c3_25 = arith.constant 3 : index
    %c0_26 = arith.constant 0 : index
    %c0_27 = arith.constant 0 : index
    %15 = vector.load %arg1[%c0_24, %c3_25, %c0_26, %c0_27] : memref<1x4x7x28xf32, #tpu.memory_space<vmem>>, vector<1x1x6x28xf32>
    %16 = vector.shape_cast %15 : vector<1x1x6x28xf32> to vector<6x28xf32>
    %c0_28 = arith.constant 0 : index
    %c0_29 = arith.constant 0 : index
    %c1_30 = arith.constant 1 : index
    %c0_31 = arith.constant 0 : index
    %17 = vector.load %arg1[%c0_28, %c0_29, %c1_30, %c0_31] : memref<1x4x7x28xf32, #tpu.memory_space<vmem>>, vector<1x1x6x28xf32>
    %18 = vector.shape_cast %17 : vector<1x1x6x28xf32> to vector<6x28xf32>
    %c0_32 = arith.constant 0 : index
    %c1_33 = arith.constant 1 : index
    %c1_34 = arith.constant 1 : index
    %c0_35 = arith.constant 0 : index
    %19 = vector.load %arg1[%c0_32, %c1_33, %c1_34, %c0_35] : memref<1x4x7x28xf32, #tpu.memory_space<vmem>>, vector<1x1x6x28xf32>
    %20 = vector.shape_cast %19 : vector<1x1x6x28xf32> to vector<6x28xf32>
    %21 = tpu.concatenate %12, %14, %16, %18, %20 in 1 : vector<6x28xf32>, vector<6x28xf32>, vector<6x28xf32>, vector<6x28xf32>, vector<6x28xf32> -> vector<6x140xf32>
    %c0_36 = arith.constant 0 : index
    %c2_37 = arith.constant 2 : index
    %c0_38 = arith.constant 0 : index
    %c0_39 = arith.constant 0 : index
    %22 = vector.load %arg1[%c0_36, %c2_37, %c0_38, %c0_39] : memref<1x4x7x28xf32, #tpu.memory_space<vmem>>, vector<1x1x6x28xf32>
    %23 = vector.shape_cast %22 : vector<1x1x6x28xf32> to vector<6x28xf32>
    %c0_40 = arith.constant 0 : index
    %c3_41 = arith.constant 3 : index
    %c0_42 = arith.constant 0 : index
    %c0_43 = arith.constant 0 : index
    %24 = vector.load %arg1[%c0_40, %c3_41, %c0_42, %c0_43] : memref<1x4x7x28xf32, #tpu.memory_space<vmem>>, vector<1x1x6x28xf32>
    %25 = vector.shape_cast %24 : vector<1x1x6x28xf32> to vector<6x28xf32>
    %c0_44 = arith.constant 0 : index
    %c0_45 = arith.constant 0 : index
    %c1_46 = arith.constant 1 : index
    %c0_47 = arith.constant 0 : index
    %26 = vector.load %arg1[%c0_44, %c0_45, %c1_46, %c0_47] : memref<1x4x7x28xf32, #tpu.memory_space<vmem>>, vector<1x1x6x28xf32>
    %27 = vector.shape_cast %26 : vector<1x1x6x28xf32> to vector<6x28xf32>
    %c0_48 = arith.constant 0 : index
    %c1_49 = arith.constant 1 : index
    %c1_50 = arith.constant 1 : index
    %c0_51 = arith.constant 0 : index
    %28 = vector.load %arg1[%c0_48, %c1_49, %c1_50, %c0_51] : memref<1x4x7x28xf32, #tpu.memory_space<vmem>>, vector<1x1x6x28xf32>
    %29 = vector.shape_cast %28 : vector<1x1x6x28xf32> to vector<6x28xf32>
    %c0_52 = arith.constant 0 : index
    %c2_53 = arith.constant 2 : index
    %c1_54 = arith.constant 1 : index
    %c0_55 = arith.constant 0 : index
    %30 = vector.load %arg1[%c0_52, %c2_53, %c1_54, %c0_55] : memref<1x4x7x28xf32, #tpu.memory_space<vmem>>, vector<1x1x6x28xf32>
    %31 = vector.shape_cast %30 : vector<1x1x6x28xf32> to vector<6x28xf32>
    %32 = tpu.concatenate %23, %25, %27, %29, %31 in 1 : vector<6x28xf32>, vector<6x28xf32>, vector<6x28xf32>, vector<6x28xf32>, vector<6x28xf32> -> vector<6x140xf32>
    %c0_56 = arith.constant 0 : index
    %c3_57 = arith.constant 3 : index
    %c0_58 = arith.constant 0 : index
    %c0_59 = arith.constant 0 : index
    %33 = vector.load %arg1[%c0_56, %c3_57, %c0_58, %c0_59] : memref<1x4x7x28xf32, #tpu.memory_space<vmem>>, vector<1x1x6x28xf32>
    %34 = vector.shape_cast %33 : vector<1x1x6x28xf32> to vector<6x28xf32>
    %c0_60 = arith.constant 0 : index
    %c0_61 = arith.constant 0 : index
    %c1_62 = arith.constant 1 : index
    %c0_63 = arith.constant 0 : index
    %35 = vector.load %arg1[%c0_60, %c0_61, %c1_62, %c0_63] : memref<1x4x7x28xf32, #tpu.memory_space<vmem>>, vector<1x1x6x28xf32>
    %36 = vector.shape_cast %35 : vector<1x1x6x28xf32> to vector<6x28xf32>
    %c0_64 = arith.constant 0 : index
    %c1_65 = arith.constant 1 : index
    %c1_66 = arith.constant 1 : index
    %c0_67 = arith.constant 0 : index
    %37 = vector.load %arg1[%c0_64, %c1_65, %c1_66, %c0_67] : memref<1x4x7x28xf32, #tpu.memory_space<vmem>>, vector<1x1x6x28xf32>
    %38 = vector.shape_cast %37 : vector<1x1x6x28xf32> to vector<6x28xf32>
    %c0_68 = arith.constant 0 : index
    %c2_69 = arith.constant 2 : index
    %c1_70 = arith.constant 1 : index
    %c0_71 = arith.constant 0 : index
    %39 = vector.load %arg1[%c0_68, %c2_69, %c1_70, %c0_71] : memref<1x4x7x28xf32, #tpu.memory_space<vmem>>, vector<1x1x6x28xf32>
    %40 = vector.shape_cast %39 : vector<1x1x6x28xf32> to vector<6x28xf32>
    %c0_72 = arith.constant 0 : index
    %c3_73 = arith.constant 3 : index
    %c1_74 = arith.constant 1 : index
    %c0_75 = arith.constant 0 : index
    %41 = vector.load %arg1[%c0_72, %c3_73, %c1_74, %c0_75] : memref<1x4x7x28xf32, #tpu.memory_space<vmem>>, vector<1x1x6x28xf32>
    %42 = vector.shape_cast %41 : vector<1x1x6x28xf32> to vector<6x28xf32>
    %43 = tpu.concatenate %34, %36, %38, %40, %42 in 1 : vector<6x28xf32>, vector<6x28xf32>, vector<6x28xf32>, vector<6x28xf32>, vector<6x28xf32> -> vector<6x140xf32>
    %44 = tpu.concatenate %10, %21, %32, %43 in 0 : vector<6x140xf32>, vector<6x140xf32>, vector<6x140xf32>, vector<6x140xf32> -> vector<24x140xf32>
    %c0_76 = arith.constant 0 : index
    %c0_77 = arith.constant 0 : index
    %45 = vector.load %arg2[%c0_76, %c0_77] : memref<2072x256xf32, #tpu.memory_space<vmem>>, vector<140x240xf32>
    %cst = arith.constant dense<0.000000e+00> : vector<24x240xf32>
    %46 = tpu.matmul %44, %45, %cst {dimension_numbers = #tpu.dot_dimension_numbers<[1], [0], [0], [1], [0, 0, 1, 1], [], []>} : vector<24x140xf32>, vector<140x240xf32>, vector<24x240xf32> -> vector<24x240xf32>
    %c144 = arith.constant 144 : index
    %c0_78 = arith.constant 0 : index
    %47 = vector.load %arg2[%c144, %c0_78] : memref<2072x256xf32, #tpu.memory_space<vmem>>, vector<1x240xf32>
    %48 = vector.broadcast %47 : vector<1x240xf32> to vector<24x240xf32>
    %49 = arith.addf %46, %48 : vector<24x240xf32>
    %50 = vector.extract_strided_slice %49 {offsets = [0, 0], sizes = [6, 240], strides = [1, 1]} : vector<24x240xf32> to vector<6x240xf32>
    %51 = vector.extract_strided_slice %49 {offsets = [6, 0], sizes = [6, 240], strides = [1, 1]} : vector<24x240xf32> to vector<6x240xf32>
    %52 = arith.maximumf %50, %51 : vector<6x240xf32>
    %53 = vector.extract_strided_slice %49 {offsets = [12, 0], sizes = [6, 240], strides = [1, 1]} : vector<24x240xf32> to vector<6x240xf32>
    %54 = vector.extract_strided_slice %49 {offsets = [18, 0], sizes = [6, 240], strides = [1, 1]} : vector<24x240xf32> to vector<6x240xf32>
    %55 = arith.maximumf %53, %54 : vector<6x240xf32>
    %56 = vector.extract_strided_slice %52 {offsets = [0, 10], sizes = [6, 230], strides = [1, 1]} : vector<6x240xf32> to vector<6x230xf32>
    %57 = vector.extract_strided_slice %52 {offsets = [0, 0], sizes = [6, 10], strides = [1, 1]} : vector<6x240xf32> to vector<6x10xf32>
    %58 = tpu.concatenate %56, %57 in 1 : vector<6x230xf32>, vector<6x10xf32> -> vector<6x240xf32>
    %59 = arith.maximumf %52, %58 : vector<6x240xf32>
    %cst_79 = arith.constant 0.000000e+00 : f32
    %60 = vector.broadcast %cst_79 : f32 to vector<6x240xf32>
    %61 = arith.maximumf %59, %60 : vector<6x240xf32>
    %62 = vector.extract_strided_slice %55 {offsets = [0, 10], sizes = [6, 230], strides = [1, 1]} : vector<6x240xf32> to vector<6x230xf32>
    %63 = vector.extract_strided_slice %55 {offsets = [0, 0], sizes = [6, 10], strides = [1, 1]} : vector<6x240xf32> to vector<6x10xf32>
    %64 = tpu.concatenate %62, %63 in 1 : vector<6x230xf32>, vector<6x10xf32> -> vector<6x240xf32>
    %65 = arith.maximumf %55, %64 : vector<6x240xf32>
    %cst_80 = arith.constant 0.000000e+00 : f32
    %66 = vector.broadcast %cst_80 : f32 to vector<6x240xf32>
    %67 = arith.maximumf %65, %66 : vector<6x240xf32>
    %68 = vector.extract_strided_slice %61 {offsets = [0, 0], sizes = [4, 240], strides = [1, 1]} : vector<6x240xf32> to vector<4x240xf32>
    %69 = vector.extract_strided_slice %67 {offsets = [0, 0], sizes = [4, 240], strides = [1, 1]} : vector<6x240xf32> to vector<4x240xf32>
    %70 = vector.extract_strided_slice %61 {offsets = [1, 0], sizes = [4, 240], strides = [1, 1]} : vector<6x240xf32> to vector<4x240xf32>
    %71 = vector.extract_strided_slice %67 {offsets = [1, 0], sizes = [4, 240], strides = [1, 1]} : vector<6x240xf32> to vector<4x240xf32>
    %72 = vector.extract_strided_slice %61 {offsets = [2, 0], sizes = [4, 240], strides = [1, 1]} : vector<6x240xf32> to vector<4x240xf32>
    %73 = tpu.concatenate %68, %69, %70, %71, %72 in 1 : vector<4x240xf32>, vector<4x240xf32>, vector<4x240xf32>, vector<4x240xf32>, vector<4x240xf32> -> vector<4x1200xf32>
    %74 = vector.extract_strided_slice %67 {offsets = [0, 0], sizes = [4, 240], strides = [1, 1]} : vector<6x240xf32> to vector<4x240xf32>
    %75 = vector.extract_strided_slice %61 {offsets = [1, 0], sizes = [4, 240], strides = [1, 1]} : vector<6x240xf32> to vector<4x240xf32>
    %76 = vector.extract_strided_slice %67 {offsets = [1, 0], sizes = [4, 240], strides = [1, 1]} : vector<6x240xf32> to vector<4x240xf32>
    %77 = vector.extract_strided_slice %61 {offsets = [2, 0], sizes = [4, 240], strides = [1, 1]} : vector<6x240xf32> to vector<4x240xf32>
    %78 = vector.extract_strided_slice %67 {offsets = [2, 0], sizes = [4, 240], strides = [1, 1]} : vector<6x240xf32> to vector<4x240xf32>
    %79 = tpu.concatenate %74, %75, %76, %77, %78 in 1 : vector<4x240xf32>, vector<4x240xf32>, vector<4x240xf32>, vector<4x240xf32>, vector<4x240xf32> -> vector<4x1200xf32>
    %80 = tpu.concatenate %73, %79 in 0 : vector<4x1200xf32>, vector<4x1200xf32> -> vector<8x1200xf32>
    %c152 = arith.constant 152 : index
    %c0_81 = arith.constant 0 : index
    %81 = vector.load %arg2[%c152, %c0_81] : memref<2072x256xf32, #tpu.memory_space<vmem>>, vector<1200x160xf32>
    %cst_82 = arith.constant dense<0.000000e+00> : vector<8x160xf32>
    %82 = tpu.matmul %80, %81, %cst_82 {dimension_numbers = #tpu.dot_dimension_numbers<[1], [0], [0], [1], [0, 0, 1, 1], [], []>} : vector<8x1200xf32>, vector<1200x160xf32>, vector<8x160xf32> -> vector<8x160xf32>
    %c1352 = arith.constant 1352 : index
    %c0_83 = arith.constant 0 : index
    %83 = vector.load %arg2[%c1352, %c0_83] : memref<2072x256xf32, #tpu.memory_space<vmem>>, vector<1x160xf32>
    %84 = vector.broadcast %83 : vector<1x160xf32> to vector<8x160xf32>
    %85 = arith.addf %82, %84 : vector<8x160xf32>
    %86 = vector.extract_strided_slice %85 {offsets = [0, 0], sizes = [4, 160], strides = [1, 1]} : vector<8x160xf32> to vector<4x160xf32>
    %87 = vector.extract_strided_slice %85 {offsets = [4, 0], sizes = [4, 160], strides = [1, 1]} : vector<8x160xf32> to vector<4x160xf32>
    %88 = arith.maximumf %86, %87 : vector<4x160xf32>
    %89 = vector.extract_strided_slice %88 {offsets = [0, 20], sizes = [4, 140], strides = [1, 1]} : vector<4x160xf32> to vector<4x140xf32>
    %90 = vector.extract_strided_slice %88 {offsets = [0, 0], sizes = [4, 20], strides = [1, 1]} : vector<4x160xf32> to vector<4x20xf32>
    %91 = tpu.concatenate %89, %90 in 1 : vector<4x140xf32>, vector<4x20xf32> -> vector<4x160xf32>
    %92 = arith.maximumf %88, %91 : vector<4x160xf32>
    %cst_84 = arith.constant 0.000000e+00 : f32
    %93 = vector.broadcast %cst_84 : f32 to vector<4x160xf32>
    %94 = arith.maximumf %92, %93 : vector<4x160xf32>
    %95 = vector.extract_strided_slice %94 {offsets = [0, 0], sizes = [1, 160], strides = [1, 1]} : vector<4x160xf32> to vector<1x160xf32>
    %96 = vector.extract_strided_slice %94 {offsets = [1, 0], sizes = [1, 160], strides = [1, 1]} : vector<4x160xf32> to vector<1x160xf32>
    %97 = vector.extract_strided_slice %94 {offsets = [2, 0], sizes = [1, 160], strides = [1, 1]} : vector<4x160xf32> to vector<1x160xf32>
    %98 = vector.extract_strided_slice %94 {offsets = [3, 0], sizes = [1, 160], strides = [1, 1]} : vector<4x160xf32> to vector<1x160xf32>
    %99 = tpu.concatenate %95, %96, %97, %98 in 1 : vector<1x160xf32>, vector<1x160xf32>, vector<1x160xf32>, vector<1x160xf32> -> vector<1x640xf32>
    %c1360 = arith.constant 1360 : index
    %c0_85 = arith.constant 0 : index
    %100 = vector.load %arg2[%c1360, %c0_85] : memref<2072x256xf32, #tpu.memory_space<vmem>>, vector<640x50xf32>
    %cst_86 = arith.constant dense<0.000000e+00> : vector<1x50xf32>
    %101 = tpu.matmul %99, %100, %cst_86 {dimension_numbers = #tpu.dot_dimension_numbers<[1], [0], [0], [1], [0, 0, 1, 1], [], []>} : vector<1x640xf32>, vector<640x50xf32>, vector<1x50xf32> -> vector<1x50xf32>
    %c2000 = arith.constant 2000 : index
    %c0_87 = arith.constant 0 : index
    %102 = vector.load %arg2[%c2000, %c0_87] : memref<2072x256xf32, #tpu.memory_space<vmem>>, vector<1x50xf32>
    %103 = arith.addf %101, %102 : vector<1x50xf32>
    %cst_88 = arith.constant 0.000000e+00 : f32
    %104 = vector.broadcast %cst_88 : f32 to vector<1x50xf32>
    %105 = arith.maximumf %103, %104 : vector<1x50xf32>
    %c2008 = arith.constant 2008 : index
    %c0_89 = arith.constant 0 : index
    %106 = vector.load %arg2[%c2008, %c0_89] : memref<2072x256xf32, #tpu.memory_space<vmem>>, vector<50x10xf32>
    %cst_90 = arith.constant dense<0.000000e+00> : vector<1x10xf32>
    %107 = tpu.matmul %105, %106, %cst_90 {dimension_numbers = #tpu.dot_dimension_numbers<[1], [0], [0], [1], [0, 0, 1, 1], [], []>} : vector<1x50xf32>, vector<50x10xf32>, vector<1x10xf32> -> vector<1x10xf32>
    %c2064 = arith.constant 2064 : index
    %c0_91 = arith.constant 0 : index
    %108 = vector.load %arg2[%c2064, %c0_91] : memref<2072x256xf32, #tpu.memory_space<vmem>>, vector<1x10xf32>
    %109 = arith.addf %107, %108 : vector<1x10xf32>
    %cst_92 = arith.constant dense<0xFF800000> : vector<1xf32>
    %110 = vector.multi_reduction <maximumf>, %109, %cst_92 [1] : vector<1x10xf32> to vector<1xf32>
    %111 = vector.shape_cast %110 : vector<1xf32> to vector<1x1xf32>
    %112 = vector.broadcast %111 : vector<1x1xf32> to vector<1x10xf32>
    %113 = arith.subf %109, %112 : vector<1x10xf32>
    %114 = math.exp %113 : vector<1x10xf32>
    %cst_93 = arith.constant dense<0.000000e+00> : vector<1xf32>
    %115 = vector.multi_reduction <add>, %114, %cst_93 [1] : vector<1x10xf32> to vector<1xf32>
    %116 = vector.shape_cast %115 : vector<1xf32> to vector<1x1xf32>
    %117 = math.log %116 : vector<1x1xf32>
    %118 = arith.addf %117, %111 : vector<1x1xf32>
    %119 = vector.broadcast %118 : vector<1x1xf32> to vector<1x10xf32>
    %120 = arith.subf %109, %119 : vector<1x10xf32>
    %c0_94 = arith.constant 0 : index
    %c0_95 = arith.constant 0 : index
    %c0_96 = arith.constant 0 : index
    %121 = vector.load %arg3[%c0_94, %c0_95, %c0_96] : memref<1x1x10xf32, #tpu.memory_space<vmem>>, vector<1x1x10xf32>
    %122 = vector.shape_cast %121 : vector<1x1x10xf32> to vector<1x10xf32>
    %123 = vector.shape_cast %120 : vector<1x10xf32> to vector<1x1x10xf32>
    tpu.vector_store %arg3[%c0_94, %c0_95, %c0_96], %123 {strides = array<i32>} : memref<1x1x10xf32, #tpu.memory_space<vmem>>, vector<1x1x10xf32>,
    return
  }
  func.func @transform_0(%arg0: i32) -> (i32, i32, i32, i32) {
    %c0_i32 = arith.constant 0 : i32
    %c0_i32_0 = arith.constant 0 : i32
    %c0_i32_1 = arith.constant 0 : i32
    %c0_i32_2 = arith.constant 0 : i32
    return %arg0, %c0_i32, %c0_i32_0, %c0_i32_1 : i32, i32, i32, i32
  }
  func.func @transform_1(%arg0: i32) -> (i32, i32) {
    %c0_i32 = arith.constant 0 : i32
    %c0_i32_0 = arith.constant 0 : i32
    %c0_i32_1 = arith.constant 0 : i32
    return %c0_i32, %c0_i32_0 : i32, i32
  }
  func.func @transform_2(%arg0: i32) -> (i32, i32, i32) {
    %c0_i32 = arith.constant 0 : i32
    %c0_i32_0 = arith.constant 0 : i32
    %c0_i32_1 = arith.constant 0 : i32
    return %arg0, %c0_i32, %c0_i32_0 : i32, i32, i32
  }
}

</mosaic_0001>

<llo_original>
// kernel: single_input_net_forward.1
$region0: #{single_input_net_forward.1}
  #allocation0 [shape = 'u32[]', space=smem, size = 0x4, offset = 0x4, fixed_abs, tag = 'smem constant byte address 0x4 - core index']
  #allocation1 [shape = 'u32[144,128]{1,0:T(1,128)}', space=vmem, size = 0x12000, scoped, tag = 'internal scratch']
  %s0 = inlined_call_operand.vmem [shape: f32[2,4,7,28], index: 0, kind: input, shape index: {}]
  %s1 = inlined_call_operand.hbm [shape: f32[2072,256], index: 1, kind: input, shape index: {}]
  %s2 = inlined_call_operand.hbm [shape: f32[2,1,10], index: 2, kind: output, shape index: {}]
  %s3 = sld [smem:[#allocation0]]
  $region45: #{single_input_net_forward.1} parent=0
    _
  %s5 = ssub.s32 1, %s3
  %s6 = scalar_select 0, %s5, %s3
  $region1: #{single_input_net_forward.1} parent=0
    #allocation2 [shape = 'u8[2121728]{0}', space=vmem, size = 0x206000, scoped, tag = 'input window, operand 1, single buffered']
    #allocation3 [shape = 's32[2]{0}', space=sflag, size = 0x8, scoped, tag = 'scoped memory for single_input_net_forward.1']
    #allocation4 [shape = 's32[2]{0}', space=sflag, size = 0x8, scoped, tag = 'scoped memory for single_input_net_forward.1']
    #allocation5 [shape = 'u8[1024]{0}', space=vmem, size = 0x400, scoped, tag = 'output window, operand 0']
    %7 = vsyncpa [#allocation3], 0
    %8 = vsyncpa [#allocation4], 0
    %s9 = scalar_lea.sflag [#allocation4], 1
    %10 = vsyncpa %s9, 0
    loop: start=0, step=1, limit=4
    $region2: #{single_input_net_forward.1} parent=1 // loop_pre_header
      _
    $region3: #{single_input_net_forward.1} parent=1 // loop_header
      %s12 = sphi 0, %s16
      %p13 = scmp.ge.s32.totalorder %s12, 4
      %s22 = sphi 0, %s24
      %s25 = sphi 0, %s22
      %s26 = sphi 0, %s25
      %s42 = sphi 0, %s26
      %s46 = sphi 0, %s46
      %s48 = sphi 0, %s46
      %s49 = sphi 0, %s48
      %s63 = sphi 0, %s49
      %s69 = sphi 0, %s71
      %s72 = sphi 0, %s69
      %s73 = sphi 0, %s72
      %s89 = sphi 0, %s73
    $region4: #{single_input_net_forward.1} parent=1 // loop_header_branch
      %15 = sbr.rel (%p13) target = $region8
    $region5: #{single_input_net_forward.1} parent=1 // loop_body
      %s17 = ssub.s32 %s12, 1
      %s18 = ssub.s32 %s12, 2
      %s19 = sadd.s32 %s12, 1
      %s20 = ssub.s32 %s12, %s19
      %p21 = scmp.eq.s32.totalorder %s20, 0
      %s23 = sadd.s32 %s22, 1
      %s24 = scalar_select %p21, %s22, %s23
      %p27 = pneg %p21
      %p28 = scmp.eq.s32.totalorder %s12, 1
      %p29 = por %p27, %p28
      %p30 = scmp.ne.s32.totalorder %s22, %s25
      %p31 = scmp.eq.s32.totalorder %s12, 0
      %p32 = por %p30, %p31
      %p33 = scmp.ne.s32.totalorder %s22, %s25
      %p34 = scmp.eq.s32.totalorder %s17, 1
      %p35 = por %p33, %p34
      %p36 = scmp.ne.s32.totalorder %s25, %s26
      %p37 = scmp.eq.s32.totalorder %s17, 0
      %p38 = por %p36, %p37
      %p39 = scmp.ne.s32.totalorder %s25, %s26
      %p40 = scmp.eq.s32.totalorder %s18, 1
      %p41 = por %p39, %p40
      %p43 = scmp.ne.s32.totalorder %s26, %s42
      %p44 = scmp.eq.s32.totalorder %s18, 0
      %p45 = por %p43, %p44
      %s47 = sadd.s32 %s46, 1
      %p50 = scmp.eq.s32.totalorder %s12, 1
      %p51 = scmp.ne.s32.totalorder %s46, %s48
      %p52 = scmp.eq.s32.totalorder %s12, 0
      %p53 = por %p51, %p52
      %p54 = scmp.ne.s32.totalorder %s46, %s48
      %p55 = scmp.eq.s32.totalorder %s17, 1
      %p56 = por %p54, %p55
      %p57 = scmp.ne.s32.totalorder %s48, %s49
      %p58 = scmp.eq.s32.totalorder %s17, 0
      %p59 = por %p57, %p58
      %p60 = scmp.ne.s32.totalorder %s48, %s49
      %p61 = scmp.eq.s32.totalorder %s18, 1
      %p62 = por %p60, %p61
      %p64 = scmp.ne.s32.totalorder %s49, %s63
      %p65 = scmp.eq.s32.totalorder %s18, 0
      %p66 = por %p64, %p65
      %s67 = ssub.s32 %s12, %s19
      %p68 = scmp.eq.s32.totalorder %s67, 0
      %s70 = sadd.s32 %s69, 1
      %s71 = scalar_select %p68, %s69, %s70
      %p74 = pneg %p68
      %p75 = scmp.eq.s32.totalorder %s12, 1
      %p76 = por %p74, %p75
      %p77 = scmp.ne.s32.totalorder %s69, %s72
      %p78 = scmp.eq.s32.totalorder %s12, 0
      %p79 = por %p77, %p78
      %p80 = scmp.ne.s32.totalorder %s69, %s72
      %p81 = scmp.eq.s32.totalorder %s17, 1
      %p82 = por %p80, %p81
      %p83 = scmp.ne.s32.totalorder %s72, %s73
      %p84 = scmp.eq.s32.totalorder %s17, 0
      %p85 = por %p83, %p84
      %p86 = scmp.ne.s32.totalorder %s72, %s73
      %p87 = scmp.eq.s32.totalorder %s18, 1
      %p88 = por %p86, %p87
      %p90 = scmp.ne.s32.totalorder %s73, %s89
      %p91 = scmp.eq.s32.totalorder %s18, 0
      %p92 = por %p90, %p91
      %p93 = scmp.le.s32.totalorder 1, %s12
      %p94 = scmp.lt.s32.totalorder %s12, 3
      %p95 = pnand %p93, %p94
      %p96 = pneg %p95
      // Predicated region
      $region9: #{single_input_net_forward.1} parent=5 // pred_check
        _
      $region10: #{single_input_net_forward.1} parent=5 // pred_check_branch
        %98 = sbr.rel (%p95) target = $region12
      $region11: #{single_input_net_forward.1} parent=5 // pred_region
        %s99 = ssub.s32 %s12, 1
        // Predicated region
        $region13: #{single_input_net_forward.1} parent=11 // pred_check
          %p100 = pneg %p59
        $region14: #{single_input_net_forward.1} parent=11 // pred_check_branch
          %102 = sbr.rel (%p100) target = $region16
        $region15: #{single_input_net_forward.1} parent=11 // pred_region
          %s104 = ssub.s32 66304, 66304
          %105 = vsyncadd [#allocation3], %s104
          %s106 = sshll.u32 [#allocation2], 4
          %s107 = int_to_ptr.vmem [resolvable:$true] %s106
          %112 = dma.hbm_to_vmem [thread:$0]  %s1, 66304, %s107, [#allocation3], 256, 256, 16
        $region16: #{single_input_net_forward.1} parent=11 // pred_fallthru
          _
      $region12: #{single_input_net_forward.1} parent=5 // pred_fallthru
        _
      %p113 = scmp.lt.s32.totalorder %s12, 2
      // Predicated region
      $region17: #{single_input_net_forward.1} parent=5 // pred_check
        %p114 = pneg %p113
      $region18: #{single_input_net_forward.1} parent=5 // pred_check_branch
        %116 = sbr.rel (%p114) target = $region20
      $region19: #{single_input_net_forward.1} parent=5 // pred_region
        // Predicated region
        $region21: #{single_input_net_forward.1} parent=19 // pred_check
          %p117 = pneg %p32
        $region22: #{single_input_net_forward.1} parent=19 // pred_check_branch
          %119 = sbr.rel (%p117) target = $region24
        $region23: #{single_input_net_forward.1} parent=19 // pred_region
          %p120 = scmp.lt.s32.totalorder %s12, 1
          %s121 = scalar_select %p120, %s12, 1
          %s122 = smul.addr %s121, 4
          %s123 = smul.addr %s122, 8
          %s124 = scalar_lea.vmem %s0, %s123
        $region24: #{single_input_net_forward.1} parent=19 // pred_fallthru
          _
      $region20: #{single_input_net_forward.1} parent=5 // pred_fallthru
        _
      %p125 = scmp.le.s32.totalorder 1, %s12
      %p126 = scmp.lt.s32.totalorder %s12, 3
      %p127 = pnand %p125, %p126
      %p128 = pneg %p127
      // Predicated region
      $region25: #{single_input_net_forward.1} parent=5 // pred_check
        _
      $region26: #{single_input_net_forward.1} parent=5 // pred_check_branch
        %130 = sbr.rel (%p127) target = $region28
      $region27: #{single_input_net_forward.1} parent=5 // pred_region
        %s131 = ssub.s32 %s12, 1
        // Predicated region
        $region29: #{single_input_net_forward.1} parent=27 // pred_check
          %p132 = pneg %p59
        $region30: #{single_input_net_forward.1} parent=27 // pred_check_branch
          %134 = sbr.rel (%p132) target = $region32
        $region31: #{single_input_net_forward.1} parent=27 // pred_region
          %135 = dma.done [#allocation3], 66304
        $region32: #{single_input_net_forward.1} parent=27 // pred_fallthru
          _
        %p136 = scmp.lt.s32.totalorder %s17, 1
        %s137 = scalar_select %p136, %s17, 1
        %s138 = smul.addr %s137, 4
        %s139 = smul.addr %s138, 8
        %s140 = scalar_lea.vmem %s0, %s139
        %p141 = pneg %p38
        %p142 = pneg %p35
        %p143 = pneg %p59
        %p144 = pneg %p56
        %p145 = pneg %p85
        %p146 = pneg %p82
        %s147 = sand.u32 %s72, 1
        %s148 = scalar_lea.sflag [#allocation4], %s147
        %s149 = sand.u32 %s72, 1
        %s150 = scalar_lea.vmem [#allocation5], %s149
        %p151 = scmp.lt.s32.totalorder %s17, 1
        %s152 = scalar_select %p151, %s17, 1
        %s153 = smul.addr %s152, 4
        %s154 = smul.addr %s153, 8
        %s155 = scalar_lea.vmem %s0, %s154
        %v156 = vld [vmem:[%s155] sm:$0x3f]
        %s157 = scalar_lea.vmem %s155, 8
        %v158 = vld [vmem:[%s157] sm:$0x3f]
        %s159 = scalar_lea.vmem %s155, 16
        %v160 = vld [vmem:[%s159] sm:$0x3f]
        %s161 = scalar_lea.vmem %s155, 24
        %v162 = vld [vmem:[%s161] sm:$0x3f]
        %v163 = vld [vmem:[%s155 + $0x1] sm:$0x3f]
        %165 = vrot.lane.b32.xlu0 %v158, 28
        %v166 = vpop.permute.xlu0 %165
        %169 = vrot.lane.b32.xlu0 %v160, 56
        %v170 = vpop.permute.xlu0 %169
        %173 = vrot.lane.b32.xlu0 %v162, 84
        %v174 = vpop.permute.xlu0 %173
        %177 = vrot.lane.b32.xlu0 %v163, 112
        %v178 = vpop.permute.xlu0 %177
        %vm180 = vcmask 228352
        %v181 = vsel %vm180, %v156, %v166
        %vm182 = vcmask 457728
        %v183 = vsel %vm182, %v181, %v170
        %vm184 = vcmask 687104
        %v185 = vsel %vm184, %v183, %v174
        %vm186 = vcmask 916480
        %v187 = vsel %vm186, %v185, %v178
        %v188 = vld [vmem:[%s157 + $0x1] sm:$0x3f]
        %189 = vrot.lane.b32.xlu0 %v160, 28
        %v190 = vpop.permute.xlu0 %189
        %192 = vrot.lane.b32.xlu0 %v162, 56
        %v193 = vpop.permute.xlu0 %192
        %195 = vrot.lane.b32.xlu0 %v163, 84
        %v196 = vpop.permute.xlu0 %195
        %199 = vrot.lane.b32.xlu0 %v188, 112
        %v200 = vpop.permute.xlu0 %199
        %v202 = vsel %vm180, %v158, %v190
        %v203 = vsel %vm182, %v202, %v193
        %v204 = vsel %vm184, %v203, %v196
        %v205 = vsel %vm186, %v204, %v200
        %v206 = vld [vmem:[%s159 + $0x1] sm:$0x3f]
        %207 = vrot.lane.b32.xlu0 %v162, 28
        %v208 = vpop.permute.xlu0 %207
        %210 = vrot.lane.b32.xlu0 %v163, 56
        %v211 = vpop.permute.xlu0 %210
        %213 = vrot.lane.b32.xlu0 %v188, 84
        %v214 = vpop.permute.xlu0 %213
        %217 = vrot.lane.b32.xlu0 %v206, 112
        %v218 = vpop.permute.xlu0 %217
        %v220 = vsel %vm180, %v160, %v208
        %v221 = vsel %vm182, %v220, %v211
        %v222 = vsel %vm184, %v221, %v214
        %v223 = vsel %vm186, %v222, %v218
        %v224 = vld [vmem:[%s161 + $0x1] sm:$0x3f]
        %225 = vrot.lane.b32.xlu0 %v163, 28
        %v226 = vpop.permute.xlu0 %225
        %228 = vrot.lane.b32.xlu0 %v188, 56
        %v229 = vpop.permute.xlu0 %228
        %231 = vrot.lane.b32.xlu0 %v206, 84
        %v232 = vpop.permute.xlu0 %231
        %235 = vrot.lane.b32.xlu0 %v224, 112
        %v236 = vpop.permute.xlu0 %235
        %v238 = vsel %vm180, %v162, %v226
        %v239 = vsel %vm182, %v238, %v229
        %v240 = vsel %vm184, %v239, %v232
        %v241 = vsel %vm186, %v240, %v236
        %v243 = vrot.slane %v205, 2
        %v244 = vrot.slane %v200, 2
        %v248 = vrot.slane %v223, 4
        %v249 = vrot.slane %v218, 4
        %v253 = vrot.slane %v241, 6
        %v254 = vrot.slane %v236, 6
        %vm257 = vcmask 1045504
        %v258 = vsel %vm257, %v187, %v243
        %v259 = vsel %vm257, %v178, %v244
        %vm260 = vcmask 1043456
        %v261 = vsel %vm260, %v243, %v248
        %v262 = vsel %vm260, %v244, %v249
        %vm263 = vcmask 1041408
        %v264 = vsel %vm263, %v248, %v253
        %v265 = vsel %vm263, %v249, %v254
        %v266 = vld [vmem:[#allocation2] sm:$0xff]
        %v267 = vld [vmem:[#allocation2 + $0x8] sm:$0xff]
        %v268 = vld [vmem:[#allocation2 + $0x10] sm:$0xff]
        %v269 = vld [vmem:[#allocation2 + $0x18] sm:$0xff]
        %v270 = vld [vmem:[#allocation2 + $0x20] sm:$0xff]
        %v271 = vld [vmem:[#allocation2 + $0x28] sm:$0xff]
        %v272 = vld [vmem:[#allocation2 + $0x30] sm:$0xff]
        %v273 = vld [vmem:[#allocation2 + $0x38] sm:$0xff]
        %v274 = vld [vmem:[#allocation2 + $0x40] sm:$0xff]
        %v275 = vld [vmem:[#allocation2 + $0x48] sm:$0xff]
        %v276 = vld [vmem:[#allocation2 + $0x50] sm:$0xff]
        %v277 = vld [vmem:[#allocation2 + $0x58] sm:$0xff]
        %v278 = vld [vmem:[#allocation2 + $0x60] sm:$0xff]
        %v279 = vld [vmem:[#allocation2 + $0x68] sm:$0xff]
        %v280 = vld [vmem:[#allocation2 + $0x70] sm:$0xff]
        %v281 = vld [vmem:[#allocation2 + $0x78] sm:$0xff]
        %v282 = vld [vmem:[#allocation2 + $0x80] sm:$0xff]
        %v283 = vld [vmem:[#allocation2 + $0x88] sm:$0xff]
        %v284 = vld [vmem:[#allocation2 + $0x90] sm:$0xff]
        %v285 = vld [vmem:[#allocation2 + $0x98] sm:$0xff]
        %v286 = vld [vmem:[#allocation2 + $0xa0] sm:$0xff]
        %v287 = vld [vmem:[#allocation2 + $0xa8] sm:$0xff]
        %v288 = vld [vmem:[#allocation2 + $0xb0] sm:$0xff]
        %v289 = vld [vmem:[#allocation2 + $0xb8] sm:$0xff]
        %v290 = vld [vmem:[#allocation2 + $0xc0] sm:$0xff]
        %v291 = vld [vmem:[#allocation2 + $0xc8] sm:$0xff]
        %v292 = vld [vmem:[#allocation2 + $0xd0] sm:$0xff]
        %v293 = vld [vmem:[#allocation2 + $0xd8] sm:$0xff]
        %v294 = vld [vmem:[#allocation2 + $0xe0] sm:$0xff]
        %v295 = vld [vmem:[#allocation2 + $0xe8] sm:$0xff]
        %v296 = vld [vmem:[#allocation2 + $0xf0] sm:$0xff]
        %v297 = vld [vmem:[#allocation2 + $0xf8] sm:$0xff]
        %v298 = vld [vmem:[#allocation2 + $0x100] sm:$0xff]
        %v299 = vld [vmem:[#allocation2 + $0x108] sm:$0xff]
        %v300 = vld [vmem:[#allocation2 + $0x110] sm:$0xf]
        %v301 = vld [vmem:[#allocation2 + $0x118] sm:$0xf]
        %s302 = scalar_lea.vmem [#allocation2], 288
        %v303 = vld [vmem:[%s302] ss:$8 sm:$0x3]
        %v305 = vlaneseq
        %v306 = vshrl.u32 %v305, 7
        %v307 = vsub.s32 0, %v306
        %v308 = vrot.slane %v303, %v307
        %v309 = vlaneseq
        %v310 = vshrl.u32 %v309, 7
        %v311 = vsub.s32 1, %v310
        %v312 = vrot.slane %v303, %v311
        %vm315 = vcmask 97280
        %v317 = vsel %vm315, %v259, 0
        %v320 = vsel %vm315, %v262, 0
        %v323 = vsel %vm315, %v265, 0
        %v326 = vsel %vm260, %v300, 0
        %v329 = vsel %vm260, %v301, 0
        %331 = vmatprep.subr.mxu0 %v297
        %332 = vmatpush1.msra.mxu0 %v296
        %333 = vmatprep.subr.mxu0 %v295
        %334 = vmatpush1.msra.mxu0 %v294
        %335 = vmatprep.subr.mxu0 %v293
        %336 = vmatpush1.msra.mxu0 %v292
        %337 = vmatprep.subr.mxu0 %v291
        %338 = vmatpush1.msra.mxu0 %v290
        %339 = vmatprep.subr.mxu0 %v289
        %340 = vmatpush1.msra.mxu0 %v288
        %341 = vmatprep.subr.mxu0 %v287
        %342 = vmatpush1.msra.mxu0 %v286
        %343 = vmatprep.subr.mxu0 %v285
        %344 = vmatpush1.msra.mxu0 %v284
        %345 = vmatprep.subr.mxu0 %v283
        %346 = vmatpush1.msra.mxu0 %v282
        %347 = vmatprep.subr.mxu0 %v281
        %348 = vmatpush1.msra.mxu0 %v280
        %349 = vmatprep.subr.mxu0 %v279
        %350 = vmatpush1.msra.mxu0 %v278
        %351 = vmatprep.subr.mxu0 %v277
        %352 = vmatpush1.msra.mxu0 %v276
        %353 = vmatprep.subr.mxu0 %v275
        %354 = vmatpush1.msra.mxu0 %v274
        %355 = vmatprep.subr.mxu0 %v273
        %356 = vmatpush1.msra.mxu0 %v272
        %357 = vmatprep.subr.mxu0 %v271
        %358 = vmatpush1.msra.mxu0 %v270
        %359 = vmatprep.subr.mxu0 %v269
        %360 = vmatpush1.msra.mxu0 %v268
        %361 = vmatprep.subr.mxu0 %v267
        %362 = vmatpush1.msra.mxu0 %v266
        %363 = vmatprep.subr.mxu0 0.0
        %364 = vmatpush2.msra.mxu0 0.0
        %365 = vmatprep.subr.mxu0 0.0
        %366 = vmatpush2.msra.mxu0 0.0
        %367 = vmatprep.subr.mxu0 0.0
        %368 = vmatpush2.msra.mxu0 0.0
        %369 = vmatprep.subr.mxu0 0.0
        %370 = vmatpush2.msra.mxu0 0.0
        %371 = vmatprep.subr.mxu0 0.0
        %372 = vmatpush2.msra.mxu0 0.0
        %373 = vmatprep.subr.mxu0 0.0
        %374 = vmatpush2.msra.mxu0 0.0
        %375 = vmatprep.subr.mxu0 0.0
        %376 = vmatpush2.msra.mxu0 0.0
        %377 = vmatprep.subr.mxu0 0.0
        %378 = vmatpush2.msra.mxu0 0.0
        %379 = vmatprep.subr.mxu0 0.0
        %380 = vmatpush2.msra.mxu0 0.0
        %381 = vmatprep.subr.mxu0 0.0
        %382 = vmatpush2.msra.mxu0 0.0
        %383 = vmatprep.subr.mxu0 0.0
        %384 = vmatpush2.msra.mxu0 0.0
        %385 = vmatprep.subr.mxu0 0.0
        %386 = vmatpush2.msra.mxu0 0.0
        %387 = vmatprep.subr.mxu0 0.0
        %388 = vmatpush2.msra.mxu0 0.0
        %389 = vmatprep.subr.mxu0 0.0
        %390 = vmatpush2.msra.mxu0 0.0
        %391 = vmatprep.subr.mxu0 %v329
        %392 = vmatpush2.msra.mxu0 %v326
        %393 = vmatprep.subr.mxu0 %v299
        %394 = vmatpush2.msra.mxu0 %v298
        %395 = vmatprep.mubr.f32.mxu0 %v317
        %396 = vmatmul.mubr.f32.gmra.mxu0 %v258
        %v397 = vpop.f32.mrf.mxu0
        %v398 = vadd.f32 %v308, %v397
        %v399 = vpop.f32.mrf.mxu0
        %v400 = vadd.f32 %v312, %v399
        %401 = vmatprep.mubr.f32.mxu0 %v320
        %402 = vmatmul.mubr.f32.gmra.mxu0 %v261
        %v403 = vpop.f32.mrf.mxu0
        %v404 = vadd.f32 %v308, %v403
        %v405 = vpop.f32.mrf.mxu0
        %v406 = vadd.f32 %v312, %v405
        %407 = vmatprep.mubr.f32.mxu0 %v323
        %408 = vmatmul.mubr.f32.gmra.mxu0 %v264
        %v409 = vpop.f32.mrf.mxu0
        %v410 = vadd.f32 %v308, %v409
        %v411 = vpop.f32.mrf.mxu0
        %v412 = vadd.f32 %v312, %v411
        %413 = vdwg.mxu0
        %v418 = vrot.slane %v398, 6
        %v419 = vrot.slane %v404, 6
        %v420 = vsel %vm263, %v418, %v419
        %v421 = vrot.slane %v400, 6
        %v422 = vrot.slane %v406, 6
        %v423 = vsel %vm263, %v421, %v422
        %v426 = vmax.f32 %v398, %v420
        %v427 = vmax.f32 %v400, %v423
        %v430 = vrot.slane %v410, 6
        %v431 = vrot.slane %v412, 6
        %v434 = vmax.f32 %v404, %v430
        %v435 = vmax.f32 %v406, %v431
        %v436 = vmax.f32 %v410, %v430
        %v437 = vmax.f32 %v412, %v431
        %440 = vrot.lane.b32.xlu0 %v426, 118
        %v441 = vpop.permute.xlu0 %440
        %442 = vrot.lane.b32.xlu0 %v427, 118
        %v443 = vpop.permute.xlu0 %442
        %vm444 = vcmask 965632
        %v445 = vsel %vm444, %v441, %v443
        %448 = vrot.lane.b32.xlu0 %v426, 102
        %v449 = vpop.permute.xlu0 %448
        %vm451 = vcmask 834560
        %v452 = vsel %vm451, %v443, %v449
        %v453 = vmax.f32 %v426, %v445
        %v454 = vmax.f32 %v427, %v452
        %v455 = vmax.f32 %v453, 0.0
        %v456 = vmax.f32 %v454, 0.0
        %461 = vrot.lane.b32.xlu0 %v434, 118
        %v462 = vpop.permute.xlu0 %461
        %463 = vrot.lane.b32.xlu0 %v435, 118
        %v464 = vpop.permute.xlu0 %463
        %465 = vrot.lane.b32.xlu0 %v436, 118
        %v466 = vpop.permute.xlu0 %465
        %467 = vrot.lane.b32.xlu0 %v437, 118
        %v468 = vpop.permute.xlu0 %467
        %v469 = vsel %vm444, %v462, %v464
        %v470 = vsel %vm444, %v466, %v468
        %475 = vrot.lane.b32.xlu0 %v434, 102
        %v476 = vpop.permute.xlu0 %475
        %477 = vrot.lane.b32.xlu0 %v436, 102
        %v478 = vpop.permute.xlu0 %477
        %v481 = vsel %vm451, %v464, %v476
        %v482 = vsel %vm451, %v468, %v478
        %v483 = vmax.f32 %v434, %v469
        %v484 = vmax.f32 %v435, %v481
        %v485 = vmax.f32 %v436, %v470
        %v486 = vmax.f32 %v437, %v482
        %v487 = vmax.f32 %v483, 0.0
        %v488 = vmax.f32 %v484, 0.0
        %v489 = vmax.f32 %v485, 0.0
        %v490 = vmax.f32 %v486, 0.0
        %v493 = vrot.slane %v487, 4
        %v494 = vrot.slane %v488, 4
        %495 = vrot.lane.b32.xlu0 %v493, 112
        %v496 = vpop.permute.xlu0 %495
        %497 = vrot.lane.b32.xlu0 %v494, 112
        %v498 = vpop.permute.xlu0 %497
        %v499 = vsel %vm186, %v496, %v498
        %v505 = vrot.slane %v455, 1
        %v506 = vrot.slane %v456, 1
        %507 = vrot.lane.b32.xlu0 %v505, 96
        %v508 = vpop.permute.xlu0 %507
        %509 = vrot.lane.b32.xlu0 %v506, 96
        %v510 = vpop.permute.xlu0 %509
        %vm511 = vcmask 785408
        %v512 = vsel %vm511, %v508, %v510
        %vm518 = vcmask 1042432
        %v519 = vrot.slane %v487, 5
        %v520 = vrot.slane %v489, 5
        %v521 = vsel %vm518, %v519, %v520
        %v522 = vrot.slane %v488, 5
        %v523 = vrot.slane %v490, 5
        %v524 = vsel %vm518, %v522, %v523
        %525 = vrot.lane.b32.xlu0 %v521, 80
        %v526 = vpop.permute.xlu0 %525
        %527 = vrot.lane.b32.xlu0 %v524, 80
        %v528 = vpop.permute.xlu0 %527
        %vm529 = vcmask 654336
        %v530 = vsel %vm529, %v526, %v528
        %v534 = vrot.slane %v455, 2
        %v535 = vrot.slane %v456, 2
        %536 = vrot.lane.b32.xlu0 %v534, 64
        %v537 = vpop.permute.xlu0 %536
        %538 = vrot.lane.b32.xlu0 %v535, 64
        %v539 = vpop.permute.xlu0 %538
        %vm540 = vcmask 523264
        %v541 = vsel %vm540, %v537, %v539
        %v545 = vsel %vm186, %v456, %v496
        %v546 = vsel %vm511, %v498, %v508
        %v547 = vsel %vm529, %v510, %v526
        %v548 = vsel %vm540, %v528, %v537
        %v549 = vrot.slane %v455, 5
        %v550 = vrot.slane %v456, 5
        %551 = vrot.lane.b32.xlu0 %v549, 112
        %v552 = vpop.permute.xlu0 %551
        %553 = vrot.lane.b32.xlu0 %v550, 112
        %v554 = vpop.permute.xlu0 %553
        %v555 = vsel %vm186, %v552, %v554
        %vm559 = vcmask 1046528
        %v560 = vrot.slane %v487, 1
        %v561 = vrot.slane %v489, 1
        %v562 = vsel %vm559, %v560, %v561
        %v563 = vrot.slane %v488, 1
        %v564 = vrot.slane %v490, 1
        %v565 = vsel %vm559, %v563, %v564
        %566 = vrot.lane.b32.xlu0 %v562, 96
        %v567 = vpop.permute.xlu0 %566
        %568 = vrot.lane.b32.xlu0 %v565, 96
        %v569 = vpop.permute.xlu0 %568
        %v570 = vsel %vm511, %v567, %v569
        %v574 = vrot.slane %v455, 6
        %v575 = vrot.slane %v456, 6
        %576 = vrot.lane.b32.xlu0 %v574, 80
        %v577 = vpop.permute.xlu0 %576
        %578 = vrot.lane.b32.xlu0 %v575, 80
        %v579 = vpop.permute.xlu0 %578
        %v580 = vsel %vm529, %v577, %v579
        %v584 = vrot.slane %v487, 2
        %v585 = vrot.slane %v489, 2
        %v586 = vsel %vm257, %v584, %v585
        %v587 = vrot.slane %v488, 2
        %v588 = vrot.slane %v490, 2
        %v589 = vsel %vm257, %v587, %v588
        %590 = vrot.lane.b32.xlu0 %v586, 64
        %v591 = vpop.permute.xlu0 %590
        %592 = vrot.lane.b32.xlu0 %v589, 64
        %v593 = vpop.permute.xlu0 %592
        %v594 = vsel %vm540, %v591, %v593
        %v598 = vsel %vm186, %v488, %v552
        %v599 = vsel %vm511, %v554, %v567
        %v600 = vsel %vm529, %v569, %v577
        %v601 = vsel %vm540, %v579, %v591
        %v602 = vsel %vm260, %v455, %v487
        %v603 = vsel %vm260, %v545, %v598
        %v604 = vsel %vm260, %v499, %v555
        %v605 = vsel %vm260, %v546, %v599
        %v606 = vsel %vm260, %v512, %v570
        %v607 = vsel %vm260, %v547, %v600
        %v608 = vsel %vm260, %v530, %v580
        %v609 = vsel %vm260, %v548, %v601
        %v610 = vsel %vm260, %v541, %v594
        %v611 = vsel %vm260, %v539, %v593
        %v612 = vld [vmem:[#allocation2 + $0x130] sm:$0xff]
        %v613 = vld [vmem:[#allocation2 + $0x138] sm:$0xff]
        %v614 = vld [vmem:[#allocation2 + $0x140] sm:$0xff]
        %v615 = vld [vmem:[#allocation2 + $0x148] sm:$0xff]
        %v616 = vld [vmem:[#allocation2 + $0x150] sm:$0xff]
        %v617 = vld [vmem:[#allocation2 + $0x158] sm:$0xff]
        %v618 = vld [vmem:[#allocation2 + $0x160] sm:$0xff]
        %v619 = vld [vmem:[#allocation2 + $0x168] sm:$0xff]
        %v620 = vld [vmem:[#allocation2 + $0x170] sm:$0xff]
        %v621 = vld [vmem:[#allocation2 + $0x178] sm:$0xff]
        %v622 = vld [vmem:[#allocation2 + $0x180] sm:$0xff]
        %v623 = vld [vmem:[#allocation2 + $0x188] sm:$0xff]
        %v624 = vld [vmem:[#allocation2 + $0x190] sm:$0xff]
        %v625 = vld [vmem:[#allocation2 + $0x198] sm:$0xff]
        %v626 = vld [vmem:[#allocation2 + $0x1a0] sm:$0xff]
        %v627 = vld [vmem:[#allocation2 + $0x1a8] sm:$0xff]
        %v628 = vld [vmem:[#allocation2 + $0x1b0] sm:$0xff]
        %v629 = vld [vmem:[#allocation2 + $0x1b8] sm:$0xff]
        %v630 = vld [vmem:[#allocation2 + $0x1c0] sm:$0xff]
        %v631 = vld [vmem:[#allocation2 + $0x1c8] sm:$0xff]
        %v632 = vld [vmem:[#allocation2 + $0x1d0] sm:$0xff]
        %v633 = vld [vmem:[#allocation2 + $0x1d8] sm:$0xff]
        %v634 = vld [vmem:[#allocation2 + $0x1e0] sm:$0xff]
        %v635 = vld [vmem:[#allocation2 + $0x1e8] sm:$0xff]
        %v636 = vld [vmem:[#allocation2 + $0x1f0] sm:$0xff]
        %v637 = vld [vmem:[#allocation2 + $0x1f8] sm:$0xff]
        %v638 = vld [vmem:[#allocation2 + $0x200] sm:$0xff]
        %v639 = vld [vmem:[#allocation2 + $0x208] sm:$0xff]
        %v640 = vld [vmem:[#allocation2 + $0x210] sm:$0xff]
        %v641 = vld [vmem:[#allocation2 + $0x218] sm:$0xff]
        %v642 = vld [vmem:[#allocation2 + $0x220] sm:$0xff]
        %v643 = vld [vmem:[#allocation2 + $0x228] sm:$0xff]
        %v644 = vld [vmem:[#allocation2 + $0x230] sm:$0xff]
        %v645 = vld [vmem:[#allocation2 + $0x238] sm:$0xff]
        %v646 = vld [vmem:[#allocation2 + $0x240] sm:$0xff]
        %v647 = vld [vmem:[#allocation2 + $0x248] sm:$0xff]
        %v648 = vld [vmem:[#allocation2 + $0x250] sm:$0xff]
        %v649 = vld [vmem:[#allocation2 + $0x258] sm:$0xff]
        %v650 = vld [vmem:[#allocation2 + $0x260] sm:$0xff]
        %v651 = vld [vmem:[#allocation2 + $0x268] sm:$0xff]
        %v652 = vld [vmem:[#allocation2 + $0x270] sm:$0xff]
        %v653 = vld [vmem:[#allocation2 + $0x278] sm:$0xff]
        %v654 = vld [vmem:[#allocation2 + $0x280] sm:$0xff]
        %v655 = vld [vmem:[#allocation2 + $0x288] sm:$0xff]
        %v656 = vld [vmem:[#allocation2 + $0x290] sm:$0xff]
        %v657 = vld [vmem:[#allocation2 + $0x298] sm:$0xff]
        %v658 = vld [vmem:[#allocation2 + $0x2a0] sm:$0xff]
        %v659 = vld [vmem:[#allocation2 + $0x2a8] sm:$0xff]
        %v660 = vld [vmem:[#allocation2 + $0x2b0] sm:$0xff]
        %v661 = vld [vmem:[#allocation2 + $0x2b8] sm:$0xff]
        %v662 = vld [vmem:[#allocation2 + $0x2c0] sm:$0xff]
        %v663 = vld [vmem:[#allocation2 + $0x2c8] sm:$0xff]
        %v664 = vld [vmem:[#allocation2 + $0x2d0] sm:$0xff]
        %v665 = vld [vmem:[#allocation2 + $0x2d8] sm:$0xff]
        %v666 = vld [vmem:[#allocation2 + $0x2e0] sm:$0xff]
        %v667 = vld [vmem:[#allocation2 + $0x2e8] sm:$0xff]
        %v668 = vld [vmem:[#allocation2 + $0x2f0] sm:$0xff]
        %v669 = vld [vmem:[#allocation2 + $0x2f8] sm:$0xff]
        %v670 = vld [vmem:[#allocation2 + $0x300] sm:$0xff]
        %v671 = vld [vmem:[#allocation2 + $0x308] sm:$0xff]
        %v672 = vld [vmem:[#allocation2 + $0x310] sm:$0xff]
        %v673 = vld [vmem:[#allocation2 + $0x318] sm:$0xff]
        %v674 = vld [vmem:[#allocation2 + $0x320] sm:$0xff]
        %v675 = vld [vmem:[#allocation2 + $0x328] sm:$0xff]
        %v676 = vld [vmem:[#allocation2 + $0x330] sm:$0xff]
        %v677 = vld [vmem:[#allocation2 + $0x338] sm:$0xff]
        %v678 = vld [vmem:[#allocation2 + $0x340] sm:$0xff]
        %v679 = vld [vmem:[#allocation2 + $0x348] sm:$0xff]
        %v680 = vld [vmem:[#allocation2 + $0x350] sm:$0xff]
        %v681 = vld [vmem:[#allocation2 + $0x358] sm:$0xff]
        %v682 = vld [vmem:[#allocation2 + $0x360] sm:$0xff]
        %v683 = vld [vmem:[#allocation2 + $0x368] sm:$0xff]
        %v684 = vld [vmem:[#allocation2 + $0x370] sm:$0xff]
        %v685 = vld [vmem:[#allocation2 + $0x378] sm:$0xff]
        %v686 = vld [vmem:[#allocation2 + $0x380] sm:$0xff]
        %v687 = vld [vmem:[#allocation2 + $0x388] sm:$0xff]
        %v688 = vld [vmem:[#allocation2 + $0x390] sm:$0xff]
        %v689 = vld [vmem:[#allocation2 + $0x398] sm:$0xff]
        %v690 = vld [vmem:[#allocation2 + $0x3a0] sm:$0xff]
        %v691 = vld [vmem:[#allocation2 + $0x3a8] sm:$0xff]
        %v692 = vld [vmem:[#allocation2 + $0x3b0] sm:$0xff]
        %v693 = vld [vmem:[#allocation2 + $0x3b8] sm:$0xff]
        %v694 = vld [vmem:[#allocation2 + $0x3c0] sm:$0xff]
        %v695 = vld [vmem:[#allocation2 + $0x3c8] sm:$0xff]
        %v696 = vld [vmem:[#allocation2 + $0x3d0] sm:$0xff]
        %v697 = vld [vmem:[#allocation2 + $0x3d8] sm:$0xff]
        %v698 = vld [vmem:[#allocation2 + $0x3e0] sm:$0xff]
        %v699 = vld [vmem:[#allocation2 + $0x3e8] sm:$0xff]
        %v700 = vld [vmem:[#allocation2 + $0x3f0] sm:$0xff]
        %v701 = vld [vmem:[#allocation2 + $0x3f8] sm:$0xff]
        %v702 = vld [vmem:[#allocation2 + $0x400] sm:$0xff]
        %v703 = vld [vmem:[#allocation2 + $0x408] sm:$0xff]
        %v704 = vld [vmem:[#allocation2 + $0x410] sm:$0xff]
        %v705 = vld [vmem:[#allocation2 + $0x418] sm:$0xff]
        %v706 = vld [vmem:[#allocation2 + $0x420] sm:$0xff]
        %v707 = vld [vmem:[#allocation2 + $0x428] sm:$0xff]
        %v708 = vld [vmem:[#allocation2 + $0x430] sm:$0xff]
        %v709 = vld [vmem:[#allocation2 + $0x438] sm:$0xff]
        %v710 = vld [vmem:[#allocation2 + $0x440] sm:$0xff]
        %v711 = vld [vmem:[#allocation2 + $0x448] sm:$0xff]
        %v712 = vld [vmem:[#allocation2 + $0x450] sm:$0xff]
        %v713 = vld [vmem:[#allocation2 + $0x458] sm:$0xff]
        %v714 = vld [vmem:[#allocation2 + $0x460] sm:$0xff]
        %v715 = vld [vmem:[#allocation2 + $0x468] sm:$0xff]
        %v716 = vld [vmem:[#allocation2 + $0x470] sm:$0xff]
        %v717 = vld [vmem:[#allocation2 + $0x478] sm:$0xff]
        %v718 = vld [vmem:[#allocation2 + $0x480] sm:$0xff]
        %v719 = vld [vmem:[#allocation2 + $0x488] sm:$0xff]
        %v720 = vld [vmem:[#allocation2 + $0x490] sm:$0xff]
        %v721 = vld [vmem:[#allocation2 + $0x498] sm:$0xff]
        %v722 = vld [vmem:[#allocation2 + $0x4a0] sm:$0xff]
        %v723 = vld [vmem:[#allocation2 + $0x4a8] sm:$0xff]
        %v724 = vld [vmem:[#allocation2 + $0x4b0] sm:$0xff]
        %v725 = vld [vmem:[#allocation2 + $0x4b8] sm:$0xff]
        %v726 = vld [vmem:[#allocation2 + $0x4c0] sm:$0xff]
        %v727 = vld [vmem:[#allocation2 + $0x4c8] sm:$0xff]
        %v728 = vld [vmem:[#allocation2 + $0x4d0] sm:$0xff]
        %v729 = vld [vmem:[#allocation2 + $0x4d8] sm:$0xff]
        %v730 = vld [vmem:[#allocation2 + $0x4e0] sm:$0xff]
        %v731 = vld [vmem:[#allocation2 + $0x4e8] sm:$0xff]
        %v732 = vld [vmem:[#allocation2 + $0x4f0] sm:$0xff]
        %v733 = vld [vmem:[#allocation2 + $0x4f8] sm:$0xff]
        %v734 = vld [vmem:[#allocation2 + $0x500] sm:$0xff]
        %v735 = vld [vmem:[#allocation2 + $0x508] sm:$0xff]
        %v736 = vld [vmem:[#allocation2 + $0x510] sm:$0xff]
        %v737 = vld [vmem:[#allocation2 + $0x518] sm:$0xff]
        %v738 = vld [vmem:[#allocation2 + $0x520] sm:$0xff]
        %v739 = vld [vmem:[#allocation2 + $0x528] sm:$0xff]
        %v740 = vld [vmem:[#allocation2 + $0x530] sm:$0xff]
        %v741 = vld [vmem:[#allocation2 + $0x538] sm:$0xff]
        %v742 = vld [vmem:[#allocation2 + $0x540] sm:$0xff]
        %v743 = vld [vmem:[#allocation2 + $0x548] sm:$0xff]
        %v744 = vld [vmem:[#allocation2 + $0x550] sm:$0xff]
        %v745 = vld [vmem:[#allocation2 + $0x558] sm:$0xff]
        %v746 = vld [vmem:[#allocation2 + $0x560] sm:$0xff]
        %v747 = vld [vmem:[#allocation2 + $0x568] sm:$0xff]
        %v748 = vld [vmem:[#allocation2 + $0x570] sm:$0xff]
        %v749 = vld [vmem:[#allocation2 + $0x578] sm:$0xff]
        %v750 = vld [vmem:[#allocation2 + $0x580] sm:$0xff]
        %v751 = vld [vmem:[#allocation2 + $0x588] sm:$0xff]
        %v752 = vld [vmem:[#allocation2 + $0x590] sm:$0xff]
        %v753 = vld [vmem:[#allocation2 + $0x598] sm:$0xff]
        %v754 = vld [vmem:[#allocation2 + $0x5a0] sm:$0xff]
        %v755 = vld [vmem:[#allocation2 + $0x5a8] sm:$0xff]
        %v756 = vld [vmem:[#allocation2 + $0x5b0] sm:$0xff]
        %v757 = vld [vmem:[#allocation2 + $0x5b8] sm:$0xff]
        %v758 = vld [vmem:[#allocation2 + $0x5c0] sm:$0xff]
        %v759 = vld [vmem:[#allocation2 + $0x5c8] sm:$0xff]
        %v760 = vld [vmem:[#allocation2 + $0x5d0] sm:$0xff]
        %v761 = vld [vmem:[#allocation2 + $0x5d8] sm:$0xff]
        %v762 = vld [vmem:[#allocation2 + $0x5e0] sm:$0xff]
        %v763 = vld [vmem:[#allocation2 + $0x5e8] sm:$0xff]
        %v764 = vld [vmem:[#allocation2 + $0x5f0] sm:$0xff]
        %v765 = vld [vmem:[#allocation2 + $0x5f8] sm:$0xff]
        %v766 = vld [vmem:[#allocation2 + $0x600] sm:$0xff]
        %v767 = vld [vmem:[#allocation2 + $0x608] sm:$0xff]
        %v768 = vld [vmem:[#allocation2 + $0x610] sm:$0xff]
        %v769 = vld [vmem:[#allocation2 + $0x618] sm:$0xff]
        %v770 = vld [vmem:[#allocation2 + $0x620] sm:$0xff]
        %v771 = vld [vmem:[#allocation2 + $0x628] sm:$0xff]
        %v772 = vld [vmem:[#allocation2 + $0x630] sm:$0xff]
        %v773 = vld [vmem:[#allocation2 + $0x638] sm:$0xff]
        %v774 = vld [vmem:[#allocation2 + $0x640] sm:$0xff]
        %v775 = vld [vmem:[#allocation2 + $0x648] sm:$0xff]
        %v776 = vld [vmem:[#allocation2 + $0x650] sm:$0xff]
        %v777 = vld [vmem:[#allocation2 + $0x658] sm:$0xff]
        %v778 = vld [vmem:[#allocation2 + $0x660] sm:$0xff]
        %v779 = vld [vmem:[#allocation2 + $0x668] sm:$0xff]
        %v780 = vld [vmem:[#allocation2 + $0x670] sm:$0xff]
        %v781 = vld [vmem:[#allocation2 + $0x678] sm:$0xff]
        %v782 = vld [vmem:[#allocation2 + $0x680] sm:$0xff]
        %v783 = vld [vmem:[#allocation2 + $0x688] sm:$0xff]
        %v784 = vld [vmem:[#allocation2 + $0x690] sm:$0xff]
        %v785 = vld [vmem:[#allocation2 + $0x698] sm:$0xff]
        %v786 = vld [vmem:[#allocation2 + $0x6a0] sm:$0xff]
        %v787 = vld [vmem:[#allocation2 + $0x6a8] sm:$0xff]
        %v788 = vld [vmem:[#allocation2 + $0x6b0] sm:$0xff]
        %v789 = vld [vmem:[#allocation2 + $0x6b8] sm:$0xff]
        %v790 = vld [vmem:[#allocation2 + $0x6c0] sm:$0xff]
        %v791 = vld [vmem:[#allocation2 + $0x6c8] sm:$0xff]
        %v792 = vld [vmem:[#allocation2 + $0x6d0] sm:$0xff]
        %v793 = vld [vmem:[#allocation2 + $0x6d8] sm:$0xff]
        %v794 = vld [vmem:[#allocation2 + $0x6e0] sm:$0xff]
        %v795 = vld [vmem:[#allocation2 + $0x6e8] sm:$0xff]
        %v796 = vld [vmem:[#allocation2 + $0x6f0] sm:$0xff]
        %v797 = vld [vmem:[#allocation2 + $0x6f8] sm:$0xff]
        %v798 = vld [vmem:[#allocation2 + $0x700] sm:$0xff]
        %v799 = vld [vmem:[#allocation2 + $0x708] sm:$0xff]
        %v800 = vld [vmem:[#allocation2 + $0x710] sm:$0xff]
        %v801 = vld [vmem:[#allocation2 + $0x718] sm:$0xff]
        %v802 = vld [vmem:[#allocation2 + $0x720] sm:$0xff]
        %v803 = vld [vmem:[#allocation2 + $0x728] sm:$0xff]
        %v804 = vld [vmem:[#allocation2 + $0x730] sm:$0xff]
        %v805 = vld [vmem:[#allocation2 + $0x738] sm:$0xff]
        %v806 = vld [vmem:[#allocation2 + $0x740] sm:$0xff]
        %v807 = vld [vmem:[#allocation2 + $0x748] sm:$0xff]
        %v808 = vld [vmem:[#allocation2 + $0x750] sm:$0xff]
        %v809 = vld [vmem:[#allocation2 + $0x758] sm:$0xff]
        %v810 = vld [vmem:[#allocation2 + $0x760] sm:$0xff]
        %v811 = vld [vmem:[#allocation2 + $0x768] sm:$0xff]
        %v812 = vld [vmem:[#allocation2 + $0x770] sm:$0xff]
        %v813 = vld [vmem:[#allocation2 + $0x778] sm:$0xff]
        %v814 = vld [vmem:[#allocation2 + $0x780] sm:$0xff]
        %v815 = vld [vmem:[#allocation2 + $0x788] sm:$0xff]
        %v816 = vld [vmem:[#allocation2 + $0x790] sm:$0xff]
        %v817 = vld [vmem:[#allocation2 + $0x798] sm:$0xff]
        %v818 = vld [vmem:[#allocation2 + $0x7a0] sm:$0xff]
        %v819 = vld [vmem:[#allocation2 + $0x7a8] sm:$0xff]
        %v820 = vld [vmem:[#allocation2 + $0x7b0] sm:$0xff]
        %v821 = vld [vmem:[#allocation2 + $0x7b8] sm:$0xff]
        %v822 = vld [vmem:[#allocation2 + $0x7c0] sm:$0xff]
        %v823 = vld [vmem:[#allocation2 + $0x7c8] sm:$0xff]
        %v824 = vld [vmem:[#allocation2 + $0x7d0] sm:$0xff]
        %v825 = vld [vmem:[#allocation2 + $0x7d8] sm:$0xff]
        %v826 = vld [vmem:[#allocation2 + $0x7e0] sm:$0xff]
        %v827 = vld [vmem:[#allocation2 + $0x7e8] sm:$0xff]
        %v828 = vld [vmem:[#allocation2 + $0x7f0] sm:$0xff]
        %v829 = vld [vmem:[#allocation2 + $0x7f8] sm:$0xff]
        %v830 = vld [vmem:[#allocation2 + $0x800] sm:$0xff]
        %v831 = vld [vmem:[#allocation2 + $0x808] sm:$0xff]
        %v832 = vld [vmem:[#allocation2 + $0x810] sm:$0xff]
        %v833 = vld [vmem:[#allocation2 + $0x818] sm:$0xff]
        %v834 = vld [vmem:[#allocation2 + $0x820] sm:$0xff]
        %v835 = vld [vmem:[#allocation2 + $0x828] sm:$0xff]
        %v836 = vld [vmem:[#allocation2 + $0x830] sm:$0xff]
        %v837 = vld [vmem:[#allocation2 + $0x838] sm:$0xff]
        %v838 = vld [vmem:[#allocation2 + $0x840] sm:$0xff]
        %v839 = vld [vmem:[#allocation2 + $0x848] sm:$0xff]
        %v840 = vld [vmem:[#allocation2 + $0x850] sm:$0xff]
        %v841 = vld [vmem:[#allocation2 + $0x858] sm:$0xff]
        %v842 = vld [vmem:[#allocation2 + $0x860] sm:$0xff]
        %v843 = vld [vmem:[#allocation2 + $0x868] sm:$0xff]
        %v844 = vld [vmem:[#allocation2 + $0x870] sm:$0xff]
        %v845 = vld [vmem:[#allocation2 + $0x878] sm:$0xff]
        %v846 = vld [vmem:[#allocation2 + $0x880] sm:$0xff]
        %v847 = vld [vmem:[#allocation2 + $0x888] sm:$0xff]
        %v848 = vld [vmem:[#allocation2 + $0x890] sm:$0xff]
        %v849 = vld [vmem:[#allocation2 + $0x898] sm:$0xff]
        %v850 = vld [vmem:[#allocation2 + $0x8a0] sm:$0xff]
        %v851 = vld [vmem:[#allocation2 + $0x8a8] sm:$0xff]
        %v852 = vld [vmem:[#allocation2 + $0x8b0] sm:$0xff]
        %v853 = vld [vmem:[#allocation2 + $0x8b8] sm:$0xff]
        %v854 = vld [vmem:[#allocation2 + $0x8c0] sm:$0xff]
        %v855 = vld [vmem:[#allocation2 + $0x8c8] sm:$0xff]
        %v856 = vld [vmem:[#allocation2 + $0x8d0] sm:$0xff]
        %v857 = vld [vmem:[#allocation2 + $0x8d8] sm:$0xff]
        %v858 = vld [vmem:[#allocation2 + $0x8e0] sm:$0xff]
        %v859 = vld [vmem:[#allocation2 + $0x8e8] sm:$0xff]
        %v860 = vld [vmem:[#allocation2 + $0x8f0] sm:$0xff]
        %v861 = vld [vmem:[#allocation2 + $0x8f8] sm:$0xff]
        %v862 = vld [vmem:[#allocation2 + $0x900] sm:$0xff]
        %v863 = vld [vmem:[#allocation2 + $0x908] sm:$0xff]
        %v864 = vld [vmem:[#allocation2 + $0x910] sm:$0xff]
        %v865 = vld [vmem:[#allocation2 + $0x918] sm:$0xff]
        %v866 = vld [vmem:[#allocation2 + $0x920] sm:$0xff]
        %v867 = vld [vmem:[#allocation2 + $0x928] sm:$0xff]
        %v868 = vld [vmem:[#allocation2 + $0x930] sm:$0xff]
        %v869 = vld [vmem:[#allocation2 + $0x938] sm:$0xff]
        %v870 = vld [vmem:[#allocation2 + $0x940] sm:$0xff]
        %v871 = vld [vmem:[#allocation2 + $0x948] sm:$0xff]
        %v872 = vld [vmem:[#allocation2 + $0x950] sm:$0xff]
        %v873 = vld [vmem:[#allocation2 + $0x958] sm:$0xff]
        %v874 = vld [vmem:[#allocation2 + $0x960] sm:$0xff]
        %v875 = vld [vmem:[#allocation2 + $0x968] sm:$0xff]
        %v876 = vld [vmem:[#allocation2 + $0x970] sm:$0xff]
        %v877 = vld [vmem:[#allocation2 + $0x978] sm:$0xff]
        %v878 = vld [vmem:[#allocation2 + $0x980] sm:$0xff]
        %v879 = vld [vmem:[#allocation2 + $0x988] sm:$0xff]
        %v880 = vld [vmem:[#allocation2 + $0x990] sm:$0xff]
        %v881 = vld [vmem:[#allocation2 + $0x998] sm:$0xff]
        %v882 = vld [vmem:[#allocation2 + $0x9a0] sm:$0xff]
        %v883 = vld [vmem:[#allocation2 + $0x9a8] sm:$0xff]
        %v884 = vld [vmem:[#allocation2 + $0x9b0] sm:$0xff]
        %v885 = vld [vmem:[#allocation2 + $0x9b8] sm:$0xff]
        %v886 = vld [vmem:[#allocation2 + $0x9c0] sm:$0xff]
        %v887 = vld [vmem:[#allocation2 + $0x9c8] sm:$0xff]
        %v888 = vld [vmem:[#allocation2 + $0x9d0] sm:$0xff]
        %v889 = vld [vmem:[#allocation2 + $0x9d8] sm:$0xff]
        %v890 = vld [vmem:[#allocation2 + $0x9e0] sm:$0xff]
        %v891 = vld [vmem:[#allocation2 + $0x9e8] sm:$0xff]
        %v892 = vld [vmem:[#allocation2 + $0x9f0] sm:$0xff]
        %v893 = vld [vmem:[#allocation2 + $0x9f8] sm:$0xff]
        %v894 = vld [vmem:[#allocation2 + $0xa00] sm:$0xff]
        %v895 = vld [vmem:[#allocation2 + $0xa08] sm:$0xff]
        %v896 = vld [vmem:[#allocation2 + $0xa10] sm:$0xff]
        %v897 = vld [vmem:[#allocation2 + $0xa18] sm:$0xff]
        %v898 = vld [vmem:[#allocation2 + $0xa20] sm:$0xff]
        %v899 = vld [vmem:[#allocation2 + $0xa28] sm:$0xff]
        %v900 = vld [vmem:[#allocation2 + $0xa30] sm:$0xff]
        %v901 = vld [vmem:[#allocation2 + $0xa38] sm:$0xff]
        %v902 = vld [vmem:[#allocation2 + $0xa40] sm:$0xff]
        %v903 = vld [vmem:[#allocation2 + $0xa48] sm:$0xff]
        %v904 = vld [vmem:[#allocation2 + $0xa50] sm:$0xff]
        %v905 = vld [vmem:[#allocation2 + $0xa58] sm:$0xff]
        %v906 = vld [vmem:[#allocation2 + $0xa60] sm:$0xff]
        %v907 = vld [vmem:[#allocation2 + $0xa68] sm:$0xff]
        %v908 = vld [vmem:[#allocation2 + $0xa70] sm:$0xff]
        %v909 = vld [vmem:[#allocation2 + $0xa78] sm:$0xff]
        %v910 = vld [vmem:[#allocation2 + $0xa80] sm:$0xff]
        %v911 = vld [vmem:[#allocation2 + $0xa88] sm:$0xff]
        %s912 = scalar_lea.vmem [#allocation2], 2704
        %v913 = vld [vmem:[%s912] ss:$8 sm:$0x3]
        %v915 = vlaneseq
        %v916 = vshrl.u32 %v915, 7
        %v917 = vsub.s32 0, %v916
        %v918 = vrot.slane %v913, %v917
        %v919 = vlaneseq
        %v920 = vshrl.u32 %v919, 7
        %v921 = vsub.s32 1, %v920
        %v922 = vrot.slane %v913, %v921
        %vm925 = vcmask 392192
        %v927 = vsel %vm925, %v611, 0
        %929 = vmatprep.subr.mxu0 %v643
        %930 = vmatpush1.msra.mxu0 %v642
        %931 = vmatprep.subr.mxu0 %v641
        %932 = vmatpush1.msra.mxu0 %v640
        %933 = vmatprep.subr.mxu0 %v639
        %934 = vmatpush1.msra.mxu0 %v638
        %935 = vmatprep.subr.mxu0 %v637
        %936 = vmatpush1.msra.mxu0 %v636
        %937 = vmatprep.subr.mxu0 %v635
        %938 = vmatpush1.msra.mxu0 %v634
        %939 = vmatprep.subr.mxu0 %v633
        %940 = vmatpush1.msra.mxu0 %v632
        %941 = vmatprep.subr.mxu0 %v631
        %942 = vmatpush1.msra.mxu0 %v630
        %943 = vmatprep.subr.mxu0 %v629
        %944 = vmatpush1.msra.mxu0 %v628
        %945 = vmatprep.subr.mxu0 %v627
        %946 = vmatpush1.msra.mxu0 %v626
        %947 = vmatprep.subr.mxu0 %v625
        %948 = vmatpush1.msra.mxu0 %v624
        %949 = vmatprep.subr.mxu0 %v623
        %950 = vmatpush1.msra.mxu0 %v622
        %951 = vmatprep.subr.mxu0 %v621
        %952 = vmatpush1.msra.mxu0 %v620
        %953 = vmatprep.subr.mxu0 %v619
        %954 = vmatpush1.msra.mxu0 %v618
        %955 = vmatprep.subr.mxu0 %v617
        %956 = vmatpush1.msra.mxu0 %v616
        %957 = vmatprep.subr.mxu0 %v615
        %958 = vmatpush1.msra.mxu0 %v614
        %959 = vmatprep.subr.mxu0 %v613
        %960 = vmatpush1.msra.mxu0 %v612
        %961 = vmatprep.subr.mxu0 %v675
        %962 = vmatpush2.msra.mxu0 %v674
        %963 = vmatprep.subr.mxu0 %v673
        %964 = vmatpush2.msra.mxu0 %v672
        %965 = vmatprep.subr.mxu0 %v671
        %966 = vmatpush2.msra.mxu0 %v670
        %967 = vmatprep.subr.mxu0 %v669
        %968 = vmatpush2.msra.mxu0 %v668
        %969 = vmatprep.subr.mxu0 %v667
        %970 = vmatpush2.msra.mxu0 %v666
        %971 = vmatprep.subr.mxu0 %v665
        %972 = vmatpush2.msra.mxu0 %v664
        %973 = vmatprep.subr.mxu0 %v663
        %974 = vmatpush2.msra.mxu0 %v662
        %975 = vmatprep.subr.mxu0 %v661
        %976 = vmatpush2.msra.mxu0 %v660
        %977 = vmatprep.subr.mxu0 %v659
        %978 = vmatpush2.msra.mxu0 %v658
        %979 = vmatprep.subr.mxu0 %v657
        %980 = vmatpush2.msra.mxu0 %v656
        %981 = vmatprep.subr.mxu0 %v655
        %982 = vmatpush2.msra.mxu0 %v654
        %983 = vmatprep.subr.mxu0 %v653
        %984 = vmatpush2.msra.mxu0 %v652
        %985 = vmatprep.subr.mxu0 %v651
        %986 = vmatpush2.msra.mxu0 %v650
        %987 = vmatprep.subr.mxu0 %v649
        %988 = vmatpush2.msra.mxu0 %v648
        %989 = vmatprep.subr.mxu0 %v647
        %990 = vmatpush2.msra.mxu0 %v646
        %991 = vmatprep.subr.mxu0 %v645
        %992 = vmatpush2.msra.mxu0 %v644
        %993 = vmatprep.mubr.f32.mxu0 %v603
        %994 = vmatmul.mubr.f32.gmra.mxu0 %v602
        %v995 = vpop.f32.mrf.mxu0
        %v996 = vadd.f32 %v918, %v995
        %v997 = vpop.f32.mrf.mxu0
        %v998 = vadd.f32 %v922, %v997
        %999 = vdwg.mxu0
        %1000 = vmatprep.subr.mxu0 %v707
        %1001 = vmatpush1.msra.mxu0 %v706
        %1002 = vmatprep.subr.mxu0 %v705
        %1003 = vmatpush1.msra.mxu0 %v704
        %1004 = vmatprep.subr.mxu0 %v703
        %1005 = vmatpush1.msra.mxu0 %v702
        %1006 = vmatprep.subr.mxu0 %v701
        %1007 = vmatpush1.msra.mxu0 %v700
        %1008 = vmatprep.subr.mxu0 %v699
        %1009 = vmatpush1.msra.mxu0 %v698
        %1010 = vmatprep.subr.mxu0 %v697
        %1011 = vmatpush1.msra.mxu0 %v696
        %1012 = vmatprep.subr.mxu0 %v695
        %1013 = vmatpush1.msra.mxu0 %v694
        %1014 = vmatprep.subr.mxu0 %v693
        %1015 = vmatpush1.msra.mxu0 %v692
        %1016 = vmatprep.subr.mxu0 %v691
        %1017 = vmatpush1.msra.mxu0 %v690
        %1018 = vmatprep.subr.mxu0 %v689
        %1019 = vmatpush1.msra.mxu0 %v688
        %1020 = vmatprep.subr.mxu0 %v687
        %1021 = vmatpush1.msra.mxu0 %v686
        %1022 = vmatprep.subr.mxu0 %v685
        %1023 = vmatpush1.msra.mxu0 %v684
        %1024 = vmatprep.subr.mxu0 %v683
        %1025 = vmatpush1.msra.mxu0 %v682
        %1026 = vmatprep.subr.mxu0 %v681
        %1027 = vmatpush1.msra.mxu0 %v680
        %1028 = vmatprep.subr.mxu0 %v679
        %1029 = vmatpush1.msra.mxu0 %v678
        %1030 = vmatprep.subr.mxu0 %v677
        %1031 = vmatpush1.msra.mxu0 %v676
        %1032 = vmatprep.subr.mxu0 %v739
        %1033 = vmatpush2.msra.mxu0 %v738
        %1034 = vmatprep.subr.mxu0 %v737
        %1035 = vmatpush2.msra.mxu0 %v736
        %1036 = vmatprep.subr.mxu0 %v735
        %1037 = vmatpush2.msra.mxu0 %v734
        %1038 = vmatprep.subr.mxu0 %v733
        %1039 = vmatpush2.msra.mxu0 %v732
        %1040 = vmatprep.subr.mxu0 %v731
        %1041 = vmatpush2.msra.mxu0 %v730
        %1042 = vmatprep.subr.mxu0 %v729
        %1043 = vmatpush2.msra.mxu0 %v728
        %1044 = vmatprep.subr.mxu0 %v727
        %1045 = vmatpush2.msra.mxu0 %v726
        %1046 = vmatprep.subr.mxu0 %v725
        %1047 = vmatpush2.msra.mxu0 %v724
        %1048 = vmatprep.subr.mxu0 %v723
        %1049 = vmatpush2.msra.mxu0 %v722
        %1050 = vmatprep.subr.mxu0 %v721
        %1051 = vmatpush2.msra.mxu0 %v720
        %1052 = vmatprep.subr.mxu0 %v719
        %1053 = vmatpush2.msra.mxu0 %v718
        %1054 = vmatprep.subr.mxu0 %v717
        %1055 = vmatpush2.msra.mxu0 %v716
        %1056 = vmatprep.subr.mxu0 %v715
        %1057 = vmatpush2.msra.mxu0 %v714
        %1058 = vmatprep.subr.mxu0 %v713
        %1059 = vmatpush2.msra.mxu0 %v712
        %1060 = vmatprep.subr.mxu0 %v711
        %1061 = vmatpush2.msra.mxu0 %v710
        %1062 = vmatprep.subr.mxu0 %v709
        %1063 = vmatpush2.msra.mxu0 %v708
        %1064 = vmatprep.mubr.f32.mxu0 %v605
        %1065 = vmatmul.mubr.f32.gmra.mxu0 %v604
        %v1066 = vpop.f32.mrf.mxu0
        %v1067 = vadd.f32 %v996, %v1066
        %v1068 = vpop.f32.mrf.mxu0
        %v1069 = vadd.f32 %v998, %v1068
        %1070 = vdwg.mxu0
        %1071 = vmatprep.subr.mxu0 %v771
        %1072 = vmatpush1.msra.mxu0 %v770
        %1073 = vmatprep.subr.mxu0 %v769
        %1074 = vmatpush1.msra.mxu0 %v768
        %1075 = vmatprep.subr.mxu0 %v767
        %1076 = vmatpush1.msra.mxu0 %v766
        %1077 = vmatprep.subr.mxu0 %v765
        %1078 = vmatpush1.msra.mxu0 %v764
        %1079 = vmatprep.subr.mxu0 %v763
        %1080 = vmatpush1.msra.mxu0 %v762
        %1081 = vmatprep.subr.mxu0 %v761
        %1082 = vmatpush1.msra.mxu0 %v760
        %1083 = vmatprep.subr.mxu0 %v759
        %1084 = vmatpush1.msra.mxu0 %v758
        %1085 = vmatprep.subr.mxu0 %v757
        %1086 = vmatpush1.msra.mxu0 %v756
        %1087 = vmatprep.subr.mxu0 %v755
        %1088 = vmatpush1.msra.mxu0 %v754
        %1089 = vmatprep.subr.mxu0 %v753
        %1090 = vmatpush1.msra.mxu0 %v752
        %1091 = vmatprep.subr.mxu0 %v751
        %1092 = vmatpush1.msra.mxu0 %v750
        %1093 = vmatprep.subr.mxu0 %v749
        %1094 = vmatpush1.msra.mxu0 %v748
        %1095 = vmatprep.subr.mxu0 %v747
        %1096 = vmatpush1.msra.mxu0 %v746
        %1097 = vmatprep.subr.mxu0 %v745
        %1098 = vmatpush1.msra.mxu0 %v744
        %1099 = vmatprep.subr.mxu0 %v743
        %1100 = vmatpush1.msra.mxu0 %v742
        %1101 = vmatprep.subr.mxu0 %v741
        %1102 = vmatpush1.msra.mxu0 %v740
        %1103 = vmatprep.subr.mxu0 %v803
        %1104 = vmatpush2.msra.mxu0 %v802
        %1105 = vmatprep.subr.mxu0 %v801
        %1106 = vmatpush2.msra.mxu0 %v800
        %1107 = vmatprep.subr.mxu0 %v799
        %1108 = vmatpush2.msra.mxu0 %v798
        %1109 = vmatprep.subr.mxu0 %v797
        %1110 = vmatpush2.msra.mxu0 %v796
        %1111 = vmatprep.subr.mxu0 %v795
        %1112 = vmatpush2.msra.mxu0 %v794
        %1113 = vmatprep.subr.mxu0 %v793
        %1114 = vmatpush2.msra.mxu0 %v792
        %1115 = vmatprep.subr.mxu0 %v791
        %1116 = vmatpush2.msra.mxu0 %v790
        %1117 = vmatprep.subr.mxu0 %v789
        %1118 = vmatpush2.msra.mxu0 %v788
        %1119 = vmatprep.subr.mxu0 %v787
        %1120 = vmatpush2.msra.mxu0 %v786
        %1121 = vmatprep.subr.mxu0 %v785
        %1122 = vmatpush2.msra.mxu0 %v784
        %1123 = vmatprep.subr.mxu0 %v783
        %1124 = vmatpush2.msra.mxu0 %v782
        %1125 = vmatprep.subr.mxu0 %v781
        %1126 = vmatpush2.msra.mxu0 %v780
        %1127 = vmatprep.subr.mxu0 %v779
        %1128 = vmatpush2.msra.mxu0 %v778
        %1129 = vmatprep.subr.mxu0 %v777
        %1130 = vmatpush2.msra.mxu0 %v776
        %1131 = vmatprep.subr.mxu0 %v775
        %1132 = vmatpush2.msra.mxu0 %v774
        %1133 = vmatprep.subr.mxu0 %v773
        %1134 = vmatpush2.msra.mxu0 %v772
        %1135 = vmatprep.mubr.f32.mxu0 %v607
        %1136 = vmatmul.mubr.f32.gmra.mxu0 %v606
        %v1137 = vpop.f32.mrf.mxu0
        %v1138 = vadd.f32 %v1067, %v1137
        %v1139 = vpop.f32.mrf.mxu0
        %v1140 = vadd.f32 %v1069, %v1139
        %1141 = vdwg.mxu0
        %1142 = vmatprep.subr.mxu0 %v835
        %1143 = vmatpush1.msra.mxu0 %v834
        %1144 = vmatprep.subr.mxu0 %v833
        %1145 = vmatpush1.msra.mxu0 %v832
        %1146 = vmatprep.subr.mxu0 %v831
        %1147 = vmatpush1.msra.mxu0 %v830
        %1148 = vmatprep.subr.mxu0 %v829
        %1149 = vmatpush1.msra.mxu0 %v828
        %1150 = vmatprep.subr.mxu0 %v827
        %1151 = vmatpush1.msra.mxu0 %v826
        %1152 = vmatprep.subr.mxu0 %v825
        %1153 = vmatpush1.msra.mxu0 %v824
        %1154 = vmatprep.subr.mxu0 %v823
        %1155 = vmatpush1.msra.mxu0 %v822
        %1156 = vmatprep.subr.mxu0 %v821
        %1157 = vmatpush1.msra.mxu0 %v820
        %1158 = vmatprep.subr.mxu0 %v819
        %1159 = vmatpush1.msra.mxu0 %v818
        %1160 = vmatprep.subr.mxu0 %v817
        %1161 = vmatpush1.msra.mxu0 %v816
        %1162 = vmatprep.subr.mxu0 %v815
        %1163 = vmatpush1.msra.mxu0 %v814
        %1164 = vmatprep.subr.mxu0 %v813
        %1165 = vmatpush1.msra.mxu0 %v812
        %1166 = vmatprep.subr.mxu0 %v811
        %1167 = vmatpush1.msra.mxu0 %v810
        %1168 = vmatprep.subr.mxu0 %v809
        %1169 = vmatpush1.msra.mxu0 %v808
        %1170 = vmatprep.subr.mxu0 %v807
        %1171 = vmatpush1.msra.mxu0 %v806
        %1172 = vmatprep.subr.mxu0 %v805
        %1173 = vmatpush1.msra.mxu0 %v804
        %1174 = vmatprep.subr.mxu0 %v867
        %1175 = vmatpush2.msra.mxu0 %v866
        %1176 = vmatprep.subr.mxu0 %v865
        %1177 = vmatpush2.msra.mxu0 %v864
        %1178 = vmatprep.subr.mxu0 %v863
        %1179 = vmatpush2.msra.mxu0 %v862
        %1180 = vmatprep.subr.mxu0 %v861
        %1181 = vmatpush2.msra.mxu0 %v860
        %1182 = vmatprep.subr.mxu0 %v859
        %1183 = vmatpush2.msra.mxu0 %v858
        %1184 = vmatprep.subr.mxu0 %v857
        %1185 = vmatpush2.msra.mxu0 %v856
        %1186 = vmatprep.subr.mxu0 %v855
        %1187 = vmatpush2.msra.mxu0 %v854
        %1188 = vmatprep.subr.mxu0 %v853
        %1189 = vmatpush2.msra.mxu0 %v852
        %1190 = vmatprep.subr.mxu0 %v851
        %1191 = vmatpush2.msra.mxu0 %v850
        %1192 = vmatprep.subr.mxu0 %v849
        %1193 = vmatpush2.msra.mxu0 %v848
        %1194 = vmatprep.subr.mxu0 %v847
        %1195 = vmatpush2.msra.mxu0 %v846
        %1196 = vmatprep.subr.mxu0 %v845
        %1197 = vmatpush2.msra.mxu0 %v844
        %1198 = vmatprep.subr.mxu0 %v843
        %1199 = vmatpush2.msra.mxu0 %v842
        %1200 = vmatprep.subr.mxu0 %v841
        %1201 = vmatpush2.msra.mxu0 %v840
        %1202 = vmatprep.subr.mxu0 %v839
        %1203 = vmatpush2.msra.mxu0 %v838
        %1204 = vmatprep.subr.mxu0 %v837
        %1205 = vmatpush2.msra.mxu0 %v836
        %1206 = vmatprep.mubr.f32.mxu0 %v609
        %1207 = vmatmul.mubr.f32.gmra.mxu0 %v608
        %v1208 = vpop.f32.mrf.mxu0
        %v1209 = vadd.f32 %v1138, %v1208
        %v1210 = vpop.f32.mrf.mxu0
        %v1211 = vadd.f32 %v1140, %v1210
        %1212 = vdwg.mxu0
        %1213 = vmatprep.subr.mxu0 %v899
        %1214 = vmatpush1.msra.mxu0 %v898
        %1215 = vmatprep.subr.mxu0 %v897
        %1216 = vmatpush1.msra.mxu0 %v896
        %1217 = vmatprep.subr.mxu0 %v895
        %1218 = vmatpush1.msra.mxu0 %v894
        %1219 = vmatprep.subr.mxu0 %v893
        %1220 = vmatpush1.msra.mxu0 %v892
        %1221 = vmatprep.subr.mxu0 %v891
        %1222 = vmatpush1.msra.mxu0 %v890
        %1223 = vmatprep.subr.mxu0 %v889
        %1224 = vmatpush1.msra.mxu0 %v888
        %1225 = vmatprep.subr.mxu0 %v887
        %1226 = vmatpush1.msra.mxu0 %v886
        %1227 = vmatprep.subr.mxu0 %v885
        %1228 = vmatpush1.msra.mxu0 %v884
        %1229 = vmatprep.subr.mxu0 %v883
        %1230 = vmatpush1.msra.mxu0 %v882
        %1231 = vmatprep.subr.mxu0 %v881
        %1232 = vmatpush1.msra.mxu0 %v880
        %1233 = vmatprep.subr.mxu0 %v879
        %1234 = vmatpush1.msra.mxu0 %v878
        %1235 = vmatprep.subr.mxu0 %v877
        %1236 = vmatpush1.msra.mxu0 %v876
        %1237 = vmatprep.subr.mxu0 %v875
        %1238 = vmatpush1.msra.mxu0 %v874
        %1239 = vmatprep.subr.mxu0 %v873
        %1240 = vmatpush1.msra.mxu0 %v872
        %1241 = vmatprep.subr.mxu0 %v871
        %1242 = vmatpush1.msra.mxu0 %v870
        %1243 = vmatprep.subr.mxu0 %v869
        %1244 = vmatpush1.msra.mxu0 %v868
        %1245 = vmatprep.subr.mxu0 0.0
        %1246 = vmatpush2.msra.mxu0 0.0
        %1247 = vmatprep.subr.mxu0 0.0
        %1248 = vmatpush2.msra.mxu0 0.0
        %1249 = vmatprep.subr.mxu0 0.0
        %1250 = vmatpush2.msra.mxu0 0.0
        %1251 = vmatprep.subr.mxu0 0.0
        %1252 = vmatpush2.msra.mxu0 0.0
        %1253 = vmatprep.subr.mxu0 0.0
        %1254 = vmatpush2.msra.mxu0 0.0
        %1255 = vmatprep.subr.mxu0 0.0
        %1256 = vmatpush2.msra.mxu0 0.0
        %1257 = vmatprep.subr.mxu0 0.0
        %1258 = vmatpush2.msra.mxu0 0.0
        %1259 = vmatprep.subr.mxu0 0.0
        %1260 = vmatpush2.msra.mxu0 0.0
        %1261 = vmatprep.subr.mxu0 0.0
        %1262 = vmatpush2.msra.mxu0 0.0
        %1263 = vmatprep.subr.mxu0 0.0
        %1264 = vmatpush2.msra.mxu0 0.0
        %1265 = vmatprep.subr.mxu0 %v911
        %1266 = vmatpush2.msra.mxu0 %v910
        %1267 = vmatprep.subr.mxu0 %v909
        %1268 = vmatpush2.msra.mxu0 %v908
        %1269 = vmatprep.subr.mxu0 %v907
        %1270 = vmatpush2.msra.mxu0 %v906
        %1271 = vmatprep.subr.mxu0 %v905
        %1272 = vmatpush2.msra.mxu0 %v904
        %1273 = vmatprep.subr.mxu0 %v903
        %1274 = vmatpush2.msra.mxu0 %v902
        %1275 = vmatprep.subr.mxu0 %v901
        %1276 = vmatpush2.msra.mxu0 %v900
        %1277 = vmatprep.mubr.f32.mxu0 %v927
        %1278 = vmatmul.mubr.f32.gmra.mxu0 %v610
        %v1279 = vpop.f32.mrf.mxu0
        %v1280 = vadd.f32 %v1209, %v1279
        %v1281 = vpop.f32.mrf.mxu0
        %v1282 = vadd.f32 %v1211, %v1281
        %1283 = vdwg.mxu0
        %v1286 = vrot.slane %v1280, 4
        %v1287 = vrot.slane %v1282, 4
        %v1290 = vmax.f32 %v1280, %v1286
        %v1291 = vmax.f32 %v1282, %v1287
        %1294 = vrot.lane.b32.xlu0 %v1290, 108
        %v1295 = vpop.permute.xlu0 %1294
        %1296 = vrot.lane.b32.xlu0 %v1291, 108
        %v1297 = vpop.permute.xlu0 %1296
        %vm1298 = vcmask 883712
        %v1299 = vsel %vm1298, %v1295, %v1297
        %1302 = vrot.lane.b32.xlu0 %v1290, 12
        %v1303 = vpop.permute.xlu0 %1302
        %v1305 = vsel %vm315, %v1297, %v1303
        %v1306 = vmax.f32 %v1290, %v1299
        %v1307 = vmax.f32 %v1291, %v1305
        %v1308 = vmax.f32 %v1306, 0.0
        %v1309 = vmax.f32 %v1307, 0.0
        %v1312 = vrot.slane %v1308, 1
        %v1313 = vrot.slane %v1309, 1
        %1314 = vrot.lane.b32.xlu0 %v1312, 32
        %v1315 = vpop.permute.xlu0 %1314
        %1316 = vrot.lane.b32.xlu0 %v1313, 32
        %v1317 = vpop.permute.xlu0 %1316
        %vm1318 = vcmask 261120
        %v1319 = vsel %vm1318, %v1315, %v1317
        %v1322 = vrot.slane %v1308, 2
        %v1323 = vrot.slane %v1309, 2
        %1324 = vrot.lane.b32.xlu0 %v1322, 64
        %v1325 = vpop.permute.xlu0 %1324
        %1326 = vrot.lane.b32.xlu0 %v1323, 64
        %v1327 = vpop.permute.xlu0 %1326
        %v1328 = vsel %vm540, %v1325, %v1327
        %v1331 = vrot.slane %v1308, 3
        %v1332 = vrot.slane %v1309, 3
        %1333 = vrot.lane.b32.xlu0 %v1331, 96
        %v1334 = vpop.permute.xlu0 %1333
        %1335 = vrot.lane.b32.xlu0 %v1332, 96
        %v1336 = vpop.permute.xlu0 %1335
        %v1337 = vsel %vm511, %v1334, %v1336
        %v1340 = vsel %vm1318, %v1309, %v1315
        %v1341 = vsel %vm540, %v1319, %v1325
        %v1342 = vsel %vm511, %v1328, %v1334
        %v1343 = vld [vmem:[#allocation2 + $0xaa0] sm:$0xff]
        %v1344 = vld [vmem:[#allocation2 + $0xab0] sm:$0xff]
        %v1345 = vld [vmem:[#allocation2 + $0xac0] sm:$0xff]
        %v1346 = vld [vmem:[#allocation2 + $0xad0] sm:$0xff]
        %v1347 = vld [vmem:[#allocation2 + $0xae0] sm:$0xff]
        %v1348 = vld [vmem:[#allocation2 + $0xaf0] sm:$0xff]
        %v1349 = vld [vmem:[#allocation2 + $0xb00] sm:$0xff]
        %v1350 = vld [vmem:[#allocation2 + $0xb10] sm:$0xff]
        %v1351 = vld [vmem:[#allocation2 + $0xb20] sm:$0xff]
        %v1352 = vld [vmem:[#allocation2 + $0xb30] sm:$0xff]
        %v1353 = vld [vmem:[#allocation2 + $0xb40] sm:$0xff]
        %v1354 = vld [vmem:[#allocation2 + $0xb50] sm:$0xff]
        %v1355 = vld [vmem:[#allocation2 + $0xb60] sm:$0xff]
        %v1356 = vld [vmem:[#allocation2 + $0xb70] sm:$0xff]
        %v1357 = vld [vmem:[#allocation2 + $0xb80] sm:$0xff]
        %v1358 = vld [vmem:[#allocation2 + $0xb90] sm:$0xff]
        %v1359 = vld [vmem:[#allocation2 + $0xba0] sm:$0xff]
        %v1360 = vld [vmem:[#allocation2 + $0xbb0] sm:$0xff]
        %v1361 = vld [vmem:[#allocation2 + $0xbc0] sm:$0xff]
        %v1362 = vld [vmem:[#allocation2 + $0xbd0] sm:$0xff]
        %v1363 = vld [vmem:[#allocation2 + $0xbe0] sm:$0xff]
        %v1364 = vld [vmem:[#allocation2 + $0xbf0] sm:$0xff]
        %v1365 = vld [vmem:[#allocation2 + $0xc00] sm:$0xff]
        %v1366 = vld [vmem:[#allocation2 + $0xc10] sm:$0xff]
        %v1367 = vld [vmem:[#allocation2 + $0xc20] sm:$0xff]
        %v1368 = vld [vmem:[#allocation2 + $0xc30] sm:$0xff]
        %v1369 = vld [vmem:[#allocation2 + $0xc40] sm:$0xff]
        %v1370 = vld [vmem:[#allocation2 + $0xc50] sm:$0xff]
        %v1371 = vld [vmem:[#allocation2 + $0xc60] sm:$0xff]
        %v1372 = vld [vmem:[#allocation2 + $0xc70] sm:$0xff]
        %v1373 = vld [vmem:[#allocation2 + $0xc80] sm:$0xff]
        %v1374 = vld [vmem:[#allocation2 + $0xc90] sm:$0xff]
        %v1375 = vld [vmem:[#allocation2 + $0xca0] sm:$0xff]
        %v1376 = vld [vmem:[#allocation2 + $0xcb0] sm:$0xff]
        %v1377 = vld [vmem:[#allocation2 + $0xcc0] sm:$0xff]
        %v1378 = vld [vmem:[#allocation2 + $0xcd0] sm:$0xff]
        %v1379 = vld [vmem:[#allocation2 + $0xce0] sm:$0xff]
        %v1380 = vld [vmem:[#allocation2 + $0xcf0] sm:$0xff]
        %v1381 = vld [vmem:[#allocation2 + $0xd00] sm:$0xff]
        %v1382 = vld [vmem:[#allocation2 + $0xd10] sm:$0xff]
        %v1383 = vld [vmem:[#allocation2 + $0xd20] sm:$0xff]
        %v1384 = vld [vmem:[#allocation2 + $0xd30] sm:$0xff]
        %v1385 = vld [vmem:[#allocation2 + $0xd40] sm:$0xff]
        %v1386 = vld [vmem:[#allocation2 + $0xd50] sm:$0xff]
        %v1387 = vld [vmem:[#allocation2 + $0xd60] sm:$0xff]
        %v1388 = vld [vmem:[#allocation2 + $0xd70] sm:$0xff]
        %v1389 = vld [vmem:[#allocation2 + $0xd80] sm:$0xff]
        %v1390 = vld [vmem:[#allocation2 + $0xd90] sm:$0xff]
        %v1391 = vld [vmem:[#allocation2 + $0xda0] sm:$0xff]
        %v1392 = vld [vmem:[#allocation2 + $0xdb0] sm:$0xff]
        %v1393 = vld [vmem:[#allocation2 + $0xdc0] sm:$0xff]
        %v1394 = vld [vmem:[#allocation2 + $0xdd0] sm:$0xff]
        %v1395 = vld [vmem:[#allocation2 + $0xde0] sm:$0xff]
        %v1396 = vld [vmem:[#allocation2 + $0xdf0] sm:$0xff]
        %v1397 = vld [vmem:[#allocation2 + $0xe00] sm:$0xff]
        %v1398 = vld [vmem:[#allocation2 + $0xe10] sm:$0xff]
        %v1399 = vld [vmem:[#allocation2 + $0xe20] sm:$0xff]
        %v1400 = vld [vmem:[#allocation2 + $0xe30] sm:$0xff]
        %v1401 = vld [vmem:[#allocation2 + $0xe40] sm:$0xff]
        %v1402 = vld [vmem:[#allocation2 + $0xe50] sm:$0xff]
        %v1403 = vld [vmem:[#allocation2 + $0xe60] sm:$0xff]
        %v1404 = vld [vmem:[#allocation2 + $0xe70] sm:$0xff]
        %v1405 = vld [vmem:[#allocation2 + $0xe80] sm:$0xff]
        %v1406 = vld [vmem:[#allocation2 + $0xe90] sm:$0xff]
        %v1407 = vld [vmem:[#allocation2 + $0xea0] sm:$0xff]
        %v1408 = vld [vmem:[#allocation2 + $0xeb0] sm:$0xff]
        %v1409 = vld [vmem:[#allocation2 + $0xec0] sm:$0xff]
        %v1410 = vld [vmem:[#allocation2 + $0xed0] sm:$0xff]
        %v1411 = vld [vmem:[#allocation2 + $0xee0] sm:$0xff]
        %v1412 = vld [vmem:[#allocation2 + $0xef0] sm:$0xff]
        %v1413 = vld [vmem:[#allocation2 + $0xf00] sm:$0xff]
        %v1414 = vld [vmem:[#allocation2 + $0xf10] sm:$0xff]
        %v1415 = vld [vmem:[#allocation2 + $0xf20] sm:$0xff]
        %v1416 = vld [vmem:[#allocation2 + $0xf30] sm:$0xff]
        %v1417 = vld [vmem:[#allocation2 + $0xf40] sm:$0xff]
        %v1418 = vld [vmem:[#allocation2 + $0xf50] sm:$0xff]
        %v1419 = vld [vmem:[#allocation2 + $0xf60] sm:$0xff]
        %v1420 = vld [vmem:[#allocation2 + $0xf70] sm:$0xff]
        %v1421 = vld [vmem:[#allocation2 + $0xf80] sm:$0xff]
        %v1422 = vld [vmem:[#allocation2 + $0xf90] sm:$0xff]
        %v1423 = vld [vmem:[#allocation2 + $0xfa0] ss:$0 sm:$0xff]
        %1424 = vmatprep.subr.mxu0 0.0
        %1425 = vmatpush1.msra.mxu0 %v1358
        %1426 = vmatprep.subr.mxu0 0.0
        %1427 = vmatpush1.msra.mxu0 %v1357
        %1428 = vmatprep.subr.mxu0 0.0
        %1429 = vmatpush1.msra.mxu0 %v1356
        %1430 = vmatprep.subr.mxu0 0.0
        %1431 = vmatpush1.msra.mxu0 %v1355
        %1432 = vmatprep.subr.mxu0 0.0
        %1433 = vmatpush1.msra.mxu0 %v1354
        %1434 = vmatprep.subr.mxu0 0.0
        %1435 = vmatpush1.msra.mxu0 %v1353
        %1436 = vmatprep.subr.mxu0 0.0
        %1437 = vmatpush1.msra.mxu0 %v1352
        %1438 = vmatprep.subr.mxu0 0.0
        %1439 = vmatpush1.msra.mxu0 %v1351
        %1440 = vmatprep.subr.mxu0 0.0
        %1441 = vmatpush1.msra.mxu0 %v1350
        %1442 = vmatprep.subr.mxu0 0.0
        %1443 = vmatpush1.msra.mxu0 %v1349
        %1444 = vmatprep.subr.mxu0 0.0
        %1445 = vmatpush1.msra.mxu0 %v1348
        %1446 = vmatprep.subr.mxu0 0.0
        %1447 = vmatpush1.msra.mxu0 %v1347
        %1448 = vmatprep.subr.mxu0 0.0
        %1449 = vmatpush1.msra.mxu0 %v1346
        %1450 = vmatprep.subr.mxu0 0.0
        %1451 = vmatpush1.msra.mxu0 %v1345
        %1452 = vmatprep.subr.mxu0 0.0
        %1453 = vmatpush1.msra.mxu0 %v1344
        %1454 = vmatprep.subr.mxu0 0.0
        %1455 = vmatpush1.msra.mxu0 %v1343
        %1456 = vmatprep.subr.mxu0 0.0
        %1457 = vmatpush2.msra.mxu0 %v1374
        %1458 = vmatprep.subr.mxu0 0.0
        %1459 = vmatpush2.msra.mxu0 %v1373
        %1460 = vmatprep.subr.mxu0 0.0
        %1461 = vmatpush2.msra.mxu0 %v1372
        %1462 = vmatprep.subr.mxu0 0.0
        %1463 = vmatpush2.msra.mxu0 %v1371
        %1464 = vmatprep.subr.mxu0 0.0
        %1465 = vmatpush2.msra.mxu0 %v1370
        %1466 = vmatprep.subr.mxu0 0.0
        %1467 = vmatpush2.msra.mxu0 %v1369
        %1468 = vmatprep.subr.mxu0 0.0
        %1469 = vmatpush2.msra.mxu0 %v1368
        %1470 = vmatprep.subr.mxu0 0.0
        %1471 = vmatpush2.msra.mxu0 %v1367
        %1472 = vmatprep.subr.mxu0 0.0
        %1473 = vmatpush2.msra.mxu0 %v1366
        %1474 = vmatprep.subr.mxu0 0.0
        %1475 = vmatpush2.msra.mxu0 %v1365
        %1476 = vmatprep.subr.mxu0 0.0
        %1477 = vmatpush2.msra.mxu0 %v1364
        %1478 = vmatprep.subr.mxu0 0.0
        %1479 = vmatpush2.msra.mxu0 %v1363
        %1480 = vmatprep.subr.mxu0 0.0
        %1481 = vmatpush2.msra.mxu0 %v1362
        %1482 = vmatprep.subr.mxu0 0.0
        %1483 = vmatpush2.msra.mxu0 %v1361
        %1484 = vmatprep.subr.mxu0 0.0
        %1485 = vmatpush2.msra.mxu0 %v1360
        %1486 = vmatprep.subr.mxu0 0.0
        %1487 = vmatpush2.msra.mxu0 %v1359
        %1488 = vmatprep.mubr.f32.mxu0 %v1340
        %1489 = vmatmul.mubr.f32.gmra.mxu0 %v1308
        %v1490 = vpop.f32.mrf.mxu0
        %v1491 = vadd.f32 %v1423, %v1490
        %v1492 = vpop.f32.mrf.mxu0
        %1493 = vdwg.mxu0
        %1494 = vmatprep.subr.mxu0 0.0
        %1495 = vmatpush1.msra.mxu0 %v1390
        %1496 = vmatprep.subr.mxu0 0.0
        %1497 = vmatpush1.msra.mxu0 %v1389
        %1498 = vmatprep.subr.mxu0 0.0
        %1499 = vmatpush1.msra.mxu0 %v1388
        %1500 = vmatprep.subr.mxu0 0.0
        %1501 = vmatpush1.msra.mxu0 %v1387
        %1502 = vmatprep.subr.mxu0 0.0
        %1503 = vmatpush1.msra.mxu0 %v1386
        %1504 = vmatprep.subr.mxu0 0.0
        %1505 = vmatpush1.msra.mxu0 %v1385
        %1506 = vmatprep.subr.mxu0 0.0
        %1507 = vmatpush1.msra.mxu0 %v1384
        %1508 = vmatprep.subr.mxu0 0.0
        %1509 = vmatpush1.msra.mxu0 %v1383
        %1510 = vmatprep.subr.mxu0 0.0
        %1511 = vmatpush1.msra.mxu0 %v1382
        %1512 = vmatprep.subr.mxu0 0.0
        %1513 = vmatpush1.msra.mxu0 %v1381
        %1514 = vmatprep.subr.mxu0 0.0
        %1515 = vmatpush1.msra.mxu0 %v1380
        %1516 = vmatprep.subr.mxu0 0.0
        %1517 = vmatpush1.msra.mxu0 %v1379
        %1518 = vmatprep.subr.mxu0 0.0
        %1519 = vmatpush1.msra.mxu0 %v1378
        %1520 = vmatprep.subr.mxu0 0.0
        %1521 = vmatpush1.msra.mxu0 %v1377
        %1522 = vmatprep.subr.mxu0 0.0
        %1523 = vmatpush1.msra.mxu0 %v1376
        %1524 = vmatprep.subr.mxu0 0.0
        %1525 = vmatpush1.msra.mxu0 %v1375
        %1526 = vmatprep.subr.mxu0 0.0
        %1527 = vmatpush2.msra.mxu0 %v1406
        %1528 = vmatprep.subr.mxu0 0.0
        %1529 = vmatpush2.msra.mxu0 %v1405
        %1530 = vmatprep.subr.mxu0 0.0
        %1531 = vmatpush2.msra.mxu0 %v1404
        %1532 = vmatprep.subr.mxu0 0.0
        %1533 = vmatpush2.msra.mxu0 %v1403
        %1534 = vmatprep.subr.mxu0 0.0
        %1535 = vmatpush2.msra.mxu0 %v1402
        %1536 = vmatprep.subr.mxu0 0.0
        %1537 = vmatpush2.msra.mxu0 %v1401
        %1538 = vmatprep.subr.mxu0 0.0
        %1539 = vmatpush2.msra.mxu0 %v1400
        %1540 = vmatprep.subr.mxu0 0.0
        %1541 = vmatpush2.msra.mxu0 %v1399
        %1542 = vmatprep.subr.mxu0 0.0
        %1543 = vmatpush2.msra.mxu0 %v1398
        %1544 = vmatprep.subr.mxu0 0.0
        %1545 = vmatpush2.msra.mxu0 %v1397
        %1546 = vmatprep.subr.mxu0 0.0
        %1547 = vmatpush2.msra.mxu0 %v1396
        %1548 = vmatprep.subr.mxu0 0.0
        %1549 = vmatpush2.msra.mxu0 %v1395
        %1550 = vmatprep.subr.mxu0 0.0
        %1551 = vmatpush2.msra.mxu0 %v1394
        %1552 = vmatprep.subr.mxu0 0.0
        %1553 = vmatpush2.msra.mxu0 %v1393
        %1554 = vmatprep.subr.mxu0 0.0
        %1555 = vmatpush2.msra.mxu0 %v1392
        %1556 = vmatprep.subr.mxu0 0.0
        %1557 = vmatpush2.msra.mxu0 %v1391
        %1558 = vmatprep.mubr.f32.mxu0 %v1342
        %1559 = vmatmul.mubr.f32.gmra.mxu0 %v1341
        %v1560 = vpop.f32.mrf.mxu0
        %v1561 = vadd.f32 %v1491, %v1560
        %v1562 = vpop.f32.mrf.mxu0
        %1563 = vdwg.mxu0
        %1564 = vmatprep.subr.mxu0 0.0
        %1565 = vmatpush1.msra.mxu0 %v1422
        %1566 = vmatprep.subr.mxu0 0.0
        %1567 = vmatpush1.msra.mxu0 %v1421
        %1568 = vmatprep.subr.mxu0 0.0
        %1569 = vmatpush1.msra.mxu0 %v1420
        %1570 = vmatprep.subr.mxu0 0.0
        %1571 = vmatpush1.msra.mxu0 %v1419
        %1572 = vmatprep.subr.mxu0 0.0
        %1573 = vmatpush1.msra.mxu0 %v1418
        %1574 = vmatprep.subr.mxu0 0.0
        %1575 = vmatpush1.msra.mxu0 %v1417
        %1576 = vmatprep.subr.mxu0 0.0
        %1577 = vmatpush1.msra.mxu0 %v1416
        %1578 = vmatprep.subr.mxu0 0.0
        %1579 = vmatpush1.msra.mxu0 %v1415
        %1580 = vmatprep.subr.mxu0 0.0
        %1581 = vmatpush1.msra.mxu0 %v1414
        %1582 = vmatprep.subr.mxu0 0.0
        %1583 = vmatpush1.msra.mxu0 %v1413
        %1584 = vmatprep.subr.mxu0 0.0
        %1585 = vmatpush1.msra.mxu0 %v1412
        %1586 = vmatprep.subr.mxu0 0.0
        %1587 = vmatpush1.msra.mxu0 %v1411
        %1588 = vmatprep.subr.mxu0 0.0
        %1589 = vmatpush1.msra.mxu0 %v1410
        %1590 = vmatprep.subr.mxu0 0.0
        %1591 = vmatpush1.msra.mxu0 %v1409
        %1592 = vmatprep.subr.mxu0 0.0
        %1593 = vmatpush1.msra.mxu0 %v1408
        %1594 = vmatprep.subr.mxu0 0.0
        %1595 = vmatpush1.msra.mxu0 %v1407
        %1596 = vmatprep.subr.mxu0 0.0
        %1597 = vmatpush2.msra.mxu0 0.0
        %1598 = vmatprep.subr.mxu0 0.0
        %1599 = vmatpush2.msra.mxu0 0.0
        %1600 = vmatprep.subr.mxu0 0.0
        %1601 = vmatpush2.msra.mxu0 0.0
        %1602 = vmatprep.subr.mxu0 0.0
        %1603 = vmatpush2.msra.mxu0 0.0
        %1604 = vmatprep.subr.mxu0 0.0
        %1605 = vmatpush2.msra.mxu0 0.0
        %1606 = vmatprep.subr.mxu0 0.0
        %1607 = vmatpush2.msra.mxu0 0.0
        %1608 = vmatprep.subr.mxu0 0.0
        %1609 = vmatpush2.msra.mxu0 0.0
        %1610 = vmatprep.subr.mxu0 0.0
        %1611 = vmatpush2.msra.mxu0 0.0
        %1612 = vmatprep.subr.mxu0 0.0
        %1613 = vmatpush2.msra.mxu0 0.0
        %1614 = vmatprep.subr.mxu0 0.0
        %1615 = vmatpush2.msra.mxu0 0.0
        %1616 = vmatprep.subr.mxu0 0.0
        %1617 = vmatpush2.msra.mxu0 0.0
        %1618 = vmatprep.subr.mxu0 0.0
        %1619 = vmatpush2.msra.mxu0 0.0
        %1620 = vmatprep.subr.mxu0 0.0
        %1621 = vmatpush2.msra.mxu0 0.0
        %1622 = vmatprep.subr.mxu0 0.0
        %1623 = vmatpush2.msra.mxu0 0.0
        %1624 = vmatprep.subr.mxu0 0.0
        %1625 = vmatpush2.msra.mxu0 0.0
        %1626 = vmatprep.subr.mxu0 0.0
        %1627 = vmatpush2.msra.mxu0 0.0
        %1628 = vmatprep.mubr.f32.mxu0 0.0
        %1629 = vmatmul.mubr.f32.gmra.mxu0 %v1337
        %v1630 = vpop.f32.mrf.mxu0
        %v1631 = vadd.f32 %v1561, %v1630
        %v1632 = vpop.f32.mrf.mxu0
        %1633 = vdwg.mxu0
        %v1634 = vmax.f32 %v1631, 0.0
        %v1635 = vld [vmem:[#allocation2 + $0xfb0] sm:$0xff]
        %v1636 = vld [vmem:[#allocation2 + $0xfc0] sm:$0xff]
        %v1637 = vld [vmem:[#allocation2 + $0xfd0] sm:$0xff]
        %v1638 = vld [vmem:[#allocation2 + $0xfe0] sm:$0xff]
        %v1639 = vld [vmem:[#allocation2 + $0xff0] sm:$0xff]
        %v1640 = vld [vmem:[#allocation2 + $0x1000] sm:$0xff]
        %v1641 = vld [vmem:[#allocation2 + $0x1010] sm:$0x3]
        %v1642 = vld [vmem:[#allocation2 + $0x1020] ss:$0 sm:$0xff]
        %vm1643 = vcmask 408576
        %v1645 = vsel %vm1643, %v1634, 0
        %v1648 = vsel %vm263, %v1641, 0
        %1650 = vmatprep.subr.mxu0 0.0
        %1651 = vmatpush1.msra.mxu0 0.0
        %1652 = vmatprep.subr.mxu0 0.0
        %1653 = vmatpush1.msra.mxu0 0.0
        %1654 = vmatprep.subr.mxu0 0.0
        %1655 = vmatpush1.msra.mxu0 0.0
        %1656 = vmatprep.subr.mxu0 0.0
        %1657 = vmatpush1.msra.mxu0 0.0
        %1658 = vmatprep.subr.mxu0 0.0
        %1659 = vmatpush1.msra.mxu0 0.0
        %1660 = vmatprep.subr.mxu0 0.0
        %1661 = vmatpush1.msra.mxu0 0.0
        %1662 = vmatprep.subr.mxu0 0.0
        %1663 = vmatpush1.msra.mxu0 0.0
        %1664 = vmatprep.subr.mxu0 0.0
        %1665 = vmatpush1.msra.mxu0 0.0
        %1666 = vmatprep.subr.mxu0 0.0
        %1667 = vmatpush1.msra.mxu0 0.0
        %1668 = vmatprep.subr.mxu0 0.0
        %1669 = vmatpush1.msra.mxu0 %v1648
        %1670 = vmatprep.subr.mxu0 0.0
        %1671 = vmatpush1.msra.mxu0 %v1640
        %1672 = vmatprep.subr.mxu0 0.0
        %1673 = vmatpush1.msra.mxu0 %v1639
        %1674 = vmatprep.subr.mxu0 0.0
        %1675 = vmatpush1.msra.mxu0 %v1638
        %1676 = vmatprep.subr.mxu0 0.0
        %1677 = vmatpush1.msra.mxu0 %v1637
        %1678 = vmatprep.subr.mxu0 0.0
        %1679 = vmatpush1.msra.mxu0 %v1636
        %1680 = vmatprep.subr.mxu0 0.0
        %1681 = vmatpush1.msra.mxu0 %v1635
        %1682 = vmatprep.subr.mxu0 0.0
        %1683 = vmatpush2.msra.mxu0 0.0
        %1684 = vmatprep.subr.mxu0 0.0
        %1685 = vmatpush2.msra.mxu0 0.0
        %1686 = vmatprep.subr.mxu0 0.0
        %1687 = vmatpush2.msra.mxu0 0.0
        %1688 = vmatprep.subr.mxu0 0.0
        %1689 = vmatpush2.msra.mxu0 0.0
        %1690 = vmatprep.subr.mxu0 0.0
        %1691 = vmatpush2.msra.mxu0 0.0
        %1692 = vmatprep.subr.mxu0 0.0
        %1693 = vmatpush2.msra.mxu0 0.0
        %1694 = vmatprep.subr.mxu0 0.0
        %1695 = vmatpush2.msra.mxu0 0.0
        %1696 = vmatprep.subr.mxu0 0.0
        %1697 = vmatpush2.msra.mxu0 0.0
        %1698 = vmatprep.subr.mxu0 0.0
        %1699 = vmatpush2.msra.mxu0 0.0
        %1700 = vmatprep.subr.mxu0 0.0
        %1701 = vmatpush2.msra.mxu0 0.0
        %1702 = vmatprep.subr.mxu0 0.0
        %1703 = vmatpush2.msra.mxu0 0.0
        %1704 = vmatprep.subr.mxu0 0.0
        %1705 = vmatpush2.msra.mxu0 0.0
        %1706 = vmatprep.subr.mxu0 0.0
        %1707 = vmatpush2.msra.mxu0 0.0
        %1708 = vmatprep.subr.mxu0 0.0
        %1709 = vmatpush2.msra.mxu0 0.0
        %1710 = vmatprep.subr.mxu0 0.0
        %1711 = vmatpush2.msra.mxu0 0.0
        %1712 = vmatprep.subr.mxu0 0.0
        %1713 = vmatpush2.msra.mxu0 0.0
        %1714 = vmatprep.mubr.f32.mxu0 0.0
        %1715 = vmatmul.mubr.f32.gmra.mxu0 %v1645
        %v1716 = vpop.f32.mrf.mxu0
        %v1717 = vadd.f32 %v1642, %v1716
        %v1718 = vpop.f32.mrf.mxu0
        %1719 = vdwg.mxu0
        %vm1720 = vcmask 73728
        %v1721 = vsel %vm1720, %v1717, -inf
        %1722 = vmax.xlane.f32.xlu0 %v1721
        %v1723 = vpop.xlane.xlu0 %1722
        %v1724 = vsub.f32 %v1717, %v1723
        %v1725 = vmul.f32 %v1724, 1.442695
        %v1726 = vpow.pop %v1725
        %v1727 = vsel %vm1720, %v1726, 0.0
        %1728 = vadd.xlane.f32.xlu0 %v1727
        %v1729 = vpop.xlane.xlu0 %1728
        %v1730 = vlog2.pop %v1729
        %v1731 = vmul.f32 %v1730, 0.6931472
        %v1732 = vadd.f32 %v1731, %v1723
        %v1733 = vsub.f32 %v1717, %v1732
        %1734 = vst.msk [vmem:[%s150] sm:$0x1] %vm1720, %v1733
        %s1735 = sand.u32 %s72, 1
        %s1736 = scalar_lea.sflag [#allocation4], %s1735
        %s1737 = sand.u32 %s72, 1
        %s1738 = scalar_lea.vmem [#allocation5], %s1737
        // Predicated region
        $region33: #{single_input_net_forward.1} parent=27 // pred_check
          %p1739 = pneg %p82
        $region34: #{single_input_net_forward.1} parent=27 // pred_check_branch
          %1741 = sbr.rel (%p1739) target = $region36
        $region35: #{single_input_net_forward.1} parent=27 // pred_region
          %s1743 = ssub.s32 16, 16
          %1744 = vsyncadd %s1736, %s1743
          %s1745 = smul.addr %s17, 16
          %s1746 = scalar_lea.hbm %s2, %s1745
          %s1748 = sshll.u32 %s1738, 4
          %s1749 = int_to_ptr.vmem [resolvable:$true] %s1748
          %1751 = dma.vmem_to_hbm [thread:$0]  %s1749, 16, %s1746, %s1736
        $region36: #{single_input_net_forward.1} parent=27 // pred_fallthru
          _
      $region28: #{single_input_net_forward.1} parent=5 // pred_fallthru
        _
      %p1752 = scmp.le.s32.totalorder 2, %s12
      // Predicated region
      $region37: #{single_input_net_forward.1} parent=5 // pred_check
        %p1753 = pneg %p1752
      $region38: #{single_input_net_forward.1} parent=5 // pred_check_branch
        %1755 = sbr.rel (%p1753) target = $region40
      $region39: #{single_input_net_forward.1} parent=5 // pred_region
        %s1756 = ssub.s32 %s12, 2
        // Predicated region
        $region41: #{single_input_net_forward.1} parent=39 // pred_check
          %p1757 = pneg %p88
        $region42: #{single_input_net_forward.1} parent=39 // pred_check_branch
          %1759 = sbr.rel (%p1757) target = $region44
        $region43: #{single_input_net_forward.1} parent=39 // pred_region
          %s1760 = sand.u32 %s73, 1
          %s1761 = scalar_lea.sflag [#allocation4], %s1760
          %s1762 = sand.u32 %s73, 1
          %s1763 = scalar_lea.vmem [#allocation5], %s1762
          %1764 = dma.done %s1761, 16
        $region44: #{single_input_net_forward.1} parent=39 // pred_fallthru
          _
      $region40: #{single_input_net_forward.1} parent=5 // pred_fallthru
        _
    $region6: #{single_input_net_forward.1} parent=1 // loop_footer
      %s16 = sadd.s32 1, %s12
    $region7: #{single_input_net_forward.1} parent=1 // loop_footer_branch
      %11 = sbr.rel target = $region3
    $region8: #{single_input_net_forward.1} parent=1 // loop_exit
      _
    %1765 = vsyncpa [#allocation3], 1
    %s1766 = scalar_lea.sflag [#allocation3], 1
    %1767 = vsyncpa %s1766, 1
    %1768 = vsyncpa [#allocation4], 1
    %s1769 = scalar_lea.sflag [#allocation4], 1
    %1770 = vsyncpa %s1769, 1

</llo_original>
